<compile_context>
chip_gen: v6e
topology: v6e:2x2x1
jax: 0.10.0
libtpu: 0.0.40
codegen_flags: <defaults>
</compile_context>

<pallas_src>
import math
from functools import partial

import jax
import jax.numpy as jnp
from jax.experimental import pallas as pl
from jax.experimental.pallas import tpu as pltpu


def _round_up(x, m):
    return ((x + m - 1) // m) * m


def _gcn_kernel(adj_ref, xk_ref, h0_ref, w_ref, *rest, alpha, residual):
    """Fused GCNII layer.

    Grid: (N_pad // tm, N_pad // tk).  Axis 0 tiles output rows (parallel),
    axis 1 is the reduction over adjacency columns (arbitrary).  The f32
    output block is VMEM-resident across the reduction axis and doubles as
    the accumulator.
    """
    if residual:
        xres_ref, out_ref = rest
    else:
        xres_ref = None
        (out_ref,) = rest

    k = pl.program_id(1)

    @pl.when(k == 0)
    def _():
        out_ref[...] = jnp.zeros_like(out_ref)

    # hi[i_tile, :] += adj[i_tile, k_tile] @ x[k_tile, :]   (bf16 MXU, f32 acc)
    out_ref[...] += jnp.dot(adj_ref[...], xk_ref[...],
                            preferred_element_type=jnp.float32)

    @pl.when(k == pl.num_programs(1) - 1)
    def _():
        hi = out_ref[...]
        support = (1.0 - alpha) * hi + alpha * h0_ref[...]
        # theta blend is pre-folded into w_ref:  W' = theta*W + (1-theta)*I
        out = jnp.dot(support, w_ref[...], preferred_element_type=jnp.float32)
        if residual:
            out = out + xres_ref[...]
        out_ref[...] = out


def graph_convolution(x, adj, h0, weight, *, lamda, alpha, l,
                      residual=False, tm=256, tk=256, cast_bf16=True):
    """Pallas implementation of GraphConvolution.forward (variant=False).

    x, h0 : (N, F) float32 node features
    adj   : (N, N) float32 dense adjacency (torch.spmm done densely)
    weight: (F, F) float32   (F_in == F_out required by the PyTorch math)
    """
    N, F = x.shape
    assert adj.shape == (N, N)
    assert h0.shape == (N, F)
    assert weight.shape == (F, F)
    assert tm % 8 == 0 and tk % 128 == 0

    theta = math.log(lamda / l + 1.0)

    # ---- padding: lane-dense feature axis, tile-divisible node axis --------
    F_pad = _round_up(F, 128)
    tm = min(tm, _round_up(N, 256))
    tk = min(tk, _round_up(N, 256))
    N_pad = _round_up(N, math.lcm(tm, tk))

    def pad2(a, rows, cols):
        return jnp.pad(a, ((0, rows - a.shape[0]), (0, cols - a.shape[1])))

    x_f32 = pad2(x.astype(jnp.float32), N_pad, F_pad)
    h0_p = pad2(h0.astype(jnp.float32), N_pad, F_pad)
    adj_p = pad2(adj, N_pad, N_pad)

    # Fold the theta blend into the weight:  out = support @ (theta*W + (1-theta)*I)
    w_p = pad2(weight.astype(jnp.float32), F_pad, F_pad)
    w_eff = theta * w_p + (1.0 - theta) * jnp.eye(F_pad, dtype=jnp.float32)

    stream_dtype = jnp.bfloat16 if cast_bf16 else jnp.float32
    adj_s = adj_p.astype(stream_dtype)
    x_s = x_f32.astype(stream_dtype)

    # ---- specs -------------------------------------------------------------
    in_specs = [
        pl.BlockSpec((tm, tk), lambda i, k: (i, k)),          # adj tile (stream dtype)
        pl.BlockSpec((tk, F_pad), lambda i, k: (k, 0)),       # x rows for reduction block
        pl.BlockSpec((tm, F_pad), lambda i, k: (i, 0)),       # h0 rows (f32)
        # Constant index map -> DMA'd once; for very large F consider
        # pipeline_mode=pl.Buffered(1) to drop the double-buffer reservation.
        pl.BlockSpec((F_pad, F_pad), lambda i, k: (0, 0)),    # W' (f32)
    ]
    args = [adj_s, x_s, h0_p, w_eff]
    if residual:
        in_specs.append(pl.BlockSpec((tm, F_pad), lambda i, k: (i, 0)))  # x residual (f32)
        args.append(x_f32)

    # ---- VMEM budget (double buffers + resident output accumulator) --------
    sd = 2 if cast_bf16 else 4
    footprint = (2 * tm * tk * sd            # adj
                 + 2 * tk * F_pad * sd       # x stream
                 + 2 * tm * F_pad * 4        # h0
                 + 2 * F_pad * F_pad * 4     # W'
                 + 2 * tm * F_pad * 4)       # output/accumulator
    if residual:
        footprint += 2 * tm * F_pad * 4
    vmem_limit = int(min(max(2 * footprint + (4 << 20), 16 << 20), 48 << 20))

    kernel = partial(_gcn_kernel, alpha=float(alpha), residual=bool(residual))

    out_p = pl.pallas_call(
        kernel,
        out_shape=jax.ShapeDtypeStruct((N_pad, F_pad), jnp.float32),
        grid_spec=pltpu.PrefetchScalarGridSpec(
            num_scalar_prefetch=0,
            grid=(N_pad // tm, N_pad // tk),
            in_specs=in_specs,
            out_specs=pl.BlockSpec((tm, F_pad), lambda i, k: (i, 0)),
            scratch_shapes=[],
        ),
        compiler_params=pltpu.CompilerParams(
            dimension_semantics=("parallel", "arbitrary"),
            vmem_limit_bytes=vmem_limit),
    )(*args)

    return out_p[:N, :F]


def graph_convolution_ref(x, adj, h0, weight, *, lamda, alpha, l,
                          residual=False):
    """Pure-JAX f32 reference mirroring the PyTorch forward (variant=False)."""
    theta = math.log(lamda / l + 1.0)
    hi = adj @ x
    support = (1.0 - alpha) * hi + alpha * h0
    r = support
    out = theta * (support @ weight) + (1.0 - theta) * r
    if residual:
        out = out + x
    return out


if __name__ == "__main__":
    # Small, deterministic problem: N=512 nodes, hidden=64 features
    # (feature axis gets zero-padded to 128 inside the wrapper).
    N, F = 512, 64
    lamda, alpha, layer_idx = 0.5, 0.1, 1
    residual = True

    key = jax.random.PRNGKey(0)
    kx, kadj, kh0, kw = jax.random.split(key, 4)

    x = jax.random.normal(kx, (N, F), dtype=jnp.float32)
    h0 = jax.random.normal(kh0, (N, F), dtype=jnp.float32)

    # Dense, row-normalized random adjacency (stand-in for torch.spmm's sparse adj).
    adj_raw = jax.random.uniform(kadj, (N, N), dtype=jnp.float32)
    adj = adj_raw / jnp.sum(adj_raw, axis=1, keepdims=True)

    # Parameter init matching reset_parameters(): U(-stdv, stdv), stdv = 1/sqrt(out_features).
    stdv = 1.0 / math.sqrt(F)
    weight = jax.random.uniform(kw, (F, F), dtype=jnp.float32,
                                minval=-stdv, maxval=stdv)

    ref = graph_convolution_ref(x, adj, h0, weight, lamda=lamda, alpha=alpha,
                                l=layer_idx, residual=residual)

    # 1) Full-precision path: should match the reference tightly.
    out_f32 = graph_convolution(x, adj, h0, weight, lamda=lamda, alpha=alpha,
                                l=layer_idx, residual=residual, cast_bf16=False)
    out_f32 = jax.block_until_ready(out_f32)
    assert out_f32.shape == (N, F)
    err_f32 = float(jnp.max(jnp.abs(out_f32 - ref)))
    assert jnp.allclose(out_f32, ref, atol=1e-4, rtol=1e-4), (
        f"f32 path mismatch vs reference: max abs err = {err_f32}")

    # 2) Fast bf16-stream path (default): f32 accumulation keeps the error tiny,
    #    but tolerance is loosened for the bf16 adjacency/feature rounding.
    out = graph_convolution(x, adj, h0, weight, lamda=lamda, alpha=alpha,
                            l=layer_idx, residual=residual)
    out = jax.block_until_ready(out)
    assert out.shape == (N, F)
    err_bf16 = float(jnp.max(jnp.abs(out - ref)))
    assert jnp.allclose(out, ref, atol=2e-2, rtol=2e-2), (
        f"bf16 path mismatch vs reference: max abs err = {err_bf16}")

    print("KERNEL_OK")
</pallas_src>

<mosaic_0001>
module attributes {stable_mosaic.version = 11 : i64} {
  func.func @_gcn_kernel(%arg0: i32, %arg1: i32, %arg2: memref<256x256xf32, #tpu.memory_space<vmem>>, %arg3: memref<256x128xf32, #tpu.memory_space<vmem>>, %arg4: memref<256x128xf32, #tpu.memory_space<vmem>>, %arg5: memref<128x128xf32, #tpu.memory_space<vmem>>, %arg6: memref<256x128xf32, #tpu.memory_space<vmem>>, %arg7: memref<256x128xf32, #tpu.memory_space<vmem>>) attributes {dimension_semantics = [#tpu.dimension_semantics<parallel>, #tpu.dimension_semantics<arbitrary>], iteration_bounds = array<i64: 2, 2>, scalar_prefetch = 0 : i64, scratch_operands = 0 : i64, tpu.core_type = #tpu.core_type<tc>, window_params = [{transform_indices = @transform_0, window_bounds = array<i64: 256, 256>}, {transform_indices = @transform_1, window_bounds = array<i64: 256, 128>}, {transform_indices = @transform_2, window_bounds = array<i64: 256, 128>}, {pipeline_mode = #tpu.pipeline_mode<synchronous>, transform_indices = @transform_3, window_bounds = array<i64: 128, 128>}, {transform_indices = @transform_4, window_bounds = array<i64: 256, 128>}, {transform_indices = @transform_5, window_bounds = array<i64: 256, 128>}]} {
    %c0_i32 = arith.constant 0 : i32
    %0 = arith.cmpi eq, %arg1, %c0_i32 : i32
    %1 = arith.extui %0 : i1 to i32
    %c0_i32_0 = arith.constant 0 : i32
    %2 = arith.cmpi ne, %1, %c0_i32_0 : i32
    scf.if %2 {
      %cst_9 = arith.constant 0.000000e+00 : f32
      %12 = vector.broadcast %cst_9 : f32 to vector<256x128xf32>
      %c0_10 = arith.constant 0 : index
      %c0_11 = arith.constant 0 : index
      %13 = vector.load %arg7[%c0_10, %c0_11] : memref<256x128xf32, #tpu.memory_space<vmem>>, vector<256x128xf32>
      tpu.vector_store %arg7[%c0_10, %c0_11], %12 {strides = array<i32>} : memref<256x128xf32, #tpu.memory_space<vmem>>, vector<256x128xf32>,
    } else {
    }
    %c0 = arith.constant 0 : index
    %c0_1 = arith.constant 0 : index
    %3 = vector.load %arg7[%c0, %c0_1] : memref<256x128xf32, #tpu.memory_space<vmem>>, vector<256x128xf32>
    %c0_2 = arith.constant 0 : index
    %c0_3 = arith.constant 0 : index
    %4 = vector.load %arg2[%c0_2, %c0_3] : memref<256x256xf32, #tpu.memory_space<vmem>>, vector<256x256xf32>
    %c0_4 = arith.constant 0 : index
    %c0_5 = arith.constant 0 : index
    %5 = vector.load %arg3[%c0_4, %c0_5] : memref<256x128xf32, #tpu.memory_space<vmem>>, vector<256x128xf32>
    %cst = arith.constant dense<0.000000e+00> : vector<256x128xf32>
    %6 = tpu.matmul %4, %5, %cst {dimension_numbers = #tpu.dot_dimension_numbers<[1], [0], [0], [1], [0, 0, 1, 1], [], []>} : vector<256x256xf32>, vector<256x128xf32>, vector<256x128xf32> -> vector<256x128xf32>
    %7 = arith.addf %3, %6 : vector<256x128xf32>
    %c0_6 = arith.constant 0 : index
    %c0_7 = arith.constant 0 : index
    %8 = vector.load %arg7[%c0_6, %c0_7] : memref<256x128xf32, #tpu.memory_space<vmem>>, vector<256x128xf32>
    tpu.vector_store %arg7[%c0_6, %c0_7], %7 {strides = array<i32>} : memref<256x128xf32, #tpu.memory_space<vmem>>, vector<256x128xf32>,
    %c1_i32 = arith.constant 1 : i32
    %9 = arith.cmpi eq, %arg1, %c1_i32 : i32
    %10 = arith.extui %9 : i1 to i32
    %c0_i32_8 = arith.constant 0 : i32
    %11 = arith.cmpi ne, %10, %c0_i32_8 : i32
    scf.if %11 {
      %c0_9 = arith.constant 0 : index
      %c0_10 = arith.constant 0 : index
      %12 = vector.load %arg7[%c0_9, %c0_10] : memref<256x128xf32, #tpu.memory_space<vmem>>, vector<256x128xf32>
      %cst_11 = arith.constant 0.899999976 : f32
      %13 = vector.broadcast %cst_11 : f32 to vector<256x128xf32>
      %14 = arith.mulf %13, %12 : vector<256x128xf32>
      %c0_12 = arith.constant 0 : index
      %c0_13 = arith.constant 0 : index
      %15 = vector.load %arg4[%c0_12, %c0_13] : memref<256x128xf32, #tpu.memory_space<vmem>>, vector<256x128xf32>
      %cst_14 = arith.constant 1.000000e-01 : f32
      %16 = vector.broadcast %cst_14 : f32 to vector<256x128xf32>
      %17 = arith.mulf %16, %15 : vector<256x128xf32>
      %18 = arith.addf %14, %17 : vector<256x128xf32>
      %c0_15 = arith.constant 0 : index
      %c0_16 = arith.constant 0 : index
      %19 = vector.load %arg5[%c0_15, %c0_16] : memref<128x128xf32, #tpu.memory_space<vmem>>, vector<128x128xf32>
      %cst_17 = arith.constant dense<0.000000e+00> : vector<256x128xf32>
      %20 = tpu.matmul %18, %19, %cst_17 {dimension_numbers = #tpu.dot_dimension_numbers<[1], [0], [0], [1], [0, 0, 1, 1], [], []>} : vector<256x128xf32>, vector<128x128xf32>, vector<256x128xf32> -> vector<256x128xf32>
      %c0_18 = arith.constant 0 : index
      %c0_19 = arith.constant 0 : index
      %21 = vector.load %arg6[%c0_18, %c0_19] : memref<256x128xf32, #tpu.memory_space<vmem>>, vector<256x128xf32>
      %22 = arith.addf %20, %21 : vector<256x128xf32>
      %c0_20 = arith.constant 0 : index
      %c0_21 = arith.constant 0 : index
      %23 = vector.load %arg7[%c0_20, %c0_21] : memref<256x128xf32, #tpu.memory_space<vmem>>, vector<256x128xf32>
      tpu.vector_store %arg7[%c0_20, %c0_21], %22 {strides = array<i32>} : memref<256x128xf32, #tpu.memory_space<vmem>>, vector<256x128xf32>,
    } else {
    }
    return
  }
  func.func @transform_0(%arg0: i32, %arg1: i32) -> (i32, i32) {
    %c0_i32 = arith.constant 0 : i32
    return %arg0, %arg1 : i32, i32
  }
  func.func @transform_1(%arg0: i32, %arg1: i32) -> (i32, i32) {
    %c0_i32 = arith.constant 0 : i32
    %c0_i32_0 = arith.constant 0 : i32
    return %arg1, %c0_i32 : i32, i32
  }
  func.func @transform_2(%arg0: i32, %arg1: i32) -> (i32, i32) {
    %c0_i32 = arith.constant 0 : i32
    %c0_i32_0 = arith.constant 0 : i32
    return %arg0, %c0_i32 : i32, i32
  }
  func.func @transform_3(%arg0: i32, %arg1: i32) -> (i32, i32) {
    %c0_i32 = arith.constant 0 : i32
    %c0_i32_0 = arith.constant 0 : i32
    %c0_i32_1 = arith.constant 0 : i32
    return %c0_i32, %c0_i32_0 : i32, i32
  }
  func.func @transform_4(%arg0: i32, %arg1: i32) -> (i32, i32) {
    %c0_i32 = arith.constant 0 : i32
    %c0_i32_0 = arith.constant 0 : i32
    return %arg0, %c0_i32 : i32, i32
  }
  func.func @transform_5(%arg0: i32, %arg1: i32) -> (i32, i32) {
    %c0_i32 = arith.constant 0 : i32
    %c0_i32_0 = arith.constant 0 : i32
    return %arg0, %c0_i32 : i32, i32
  }
}

</mosaic_0001>

<llo_original>
// kernel: tpu_custom_call.1
$region0: #{tpu_custom_call.1}
  #allocation0 [shape = 'u32[]', space=smem, size = 0x4, offset = 0x4, fixed_abs, tag = 'smem constant byte address 0x4 - core index']
  #allocation1 [shape = 'u32[144,128]{1,0:T(1,128)}', space=vmem, size = 0x12000, scoped, tag = 'internal scratch']
  %s0 = inlined_call_operand.hbm [shape: f32[512,512], index: 0, kind: input, shape index: {}]
  %s1 = inlined_call_operand.hbm [shape: f32[512,128], index: 1, kind: input, shape index: {}]
  %s2 = inlined_call_operand.hbm [shape: f32[512,128], index: 2, kind: input, shape index: {}]
  %s3 = inlined_call_operand.hbm [shape: f32[128,128], index: 3, kind: input, shape index: {}]
  %s4 = inlined_call_operand.hbm [shape: f32[512,128], index: 4, kind: input, shape index: {}]
  %s5 = inlined_call_operand.hbm [shape: f32[512,128], index: 5, kind: output, shape index: {}]
  %s6 = sld [smem:[#allocation0]]
  $region81: #{tpu_custom_call.1} parent=0
    _
  %s8 = ssub.s32 1, %s6
  %s9 = scalar_select 0, %s8, %s6
  $region1: #{tpu_custom_call.1} parent=0
    #allocation2 [shape = 'u8[524288]{0}', space=vmem, size = 0x80000, scoped, tag = 'input window, operand 0']
    #allocation3 [shape = 's32[2]{0}', space=sflag, size = 0x8, scoped, tag = 'scoped memory for tpu_custom_call.1']
    #allocation4 [shape = 's32[2]{0}', space=sflag, size = 0x8, scoped, tag = 'scoped memory for tpu_custom_call.1']
    #allocation5 [shape = 'u8[262144]{0}', space=vmem, size = 0x40000, scoped, tag = 'input window, operand 1']
    #allocation6 [shape = 's32[2]{0}', space=sflag, size = 0x8, scoped, tag = 'scoped memory for tpu_custom_call.1']
    #allocation7 [shape = 'u8[262144]{0}', space=vmem, size = 0x40000, scoped, tag = 'input window, operand 2']
    #allocation8 [shape = 'u8[65536]{0}', space=vmem, size = 0x10000, scoped, tag = 'input window, operand 3, single buffered']
    #allocation9 [shape = 's32[1]{0}', space=sflag, size = 0x4, scoped, tag = 'scoped memory for tpu_custom_call.1']
    #allocation10 [shape = 'u8[262144]{0}', space=vmem, size = 0x40000, scoped, tag = 'input window, operand 4']
    #allocation11 [shape = 'u8[262144]{0}', space=vmem, size = 0x40000, scoped, tag = 'output window, operand 0']
    %10 = vsyncpa [#allocation3], 0
    %s11 = scalar_lea.sflag [#allocation3], 1
    %12 = vsyncpa %s11, 0
    %13 = vsyncpa [#allocation6], 0
    %s14 = scalar_lea.sflag [#allocation6], 1
    %15 = vsyncpa %s14, 0
    %16 = vsyncpa [#allocation9], 0
    %17 = vsyncpa [#allocation4], 0
    %s18 = scalar_lea.sflag [#allocation4], 1
    %19 = vsyncpa %s18, 0
    loop: start=0, step=1, limit=6
    $region2: #{tpu_custom_call.1} parent=1 // loop_pre_header
      _
    $region3: #{tpu_custom_call.1} parent=1 // loop_header
      %s21 = sphi 0, %s25
      %p22 = scmp.ge.s32.totalorder %s21, 6
      %s28 = sphi 0, %s40
      %s29 = sphi 0, %s36
      %s30 = sphi 0, %s28
      %s31 = sphi 0, %s29
      %s32 = sphi 0, %s30
      %s33 = sphi 0, %s31
      %s45 = sphi 0, %s47
      %s48 = sphi 0, %s45
      %s49 = sphi 0, %s48
      %s65 = sphi 0, %s49
      %s71 = sphi 0, %s73
      %s74 = sphi 0, %s71
      %s75 = sphi 0, %s74
      %s91 = sphi 0, %s75
      %s97 = sphi 0, %s99
      %s100 = sphi 0, %s97
      %s101 = sphi 0, %s100
      %s117 = sphi 0, %s101
      %s121 = sphi 0, %s121
      %s123 = sphi 0, %s121
      %s124 = sphi 0, %s123
      %s138 = sphi 0, %s124
      %s144 = sphi 0, %s146
      %s147 = sphi 0, %s144
      %s148 = sphi 0, %s147
      %s164 = sphi 0, %s148
      %s170 = sphi 0, %s172
      %s173 = sphi 0, %s170
      %s174 = sphi 0, %s173
      %s190 = sphi 0, %s174
    $region4: #{tpu_custom_call.1} parent=1 // loop_header_branch
      %24 = sbr.rel (%p22) target = $region8
    $region5: #{tpu_custom_call.1} parent=1 // loop_body
      %s26 = ssub.s32 %s21, 1
      %s27 = ssub.s32 %s21, 2
      %s34 = sadd.s32 1, %s29
      %p35 = scmp.ge.s32.totalorder %s34, 2
      %s36 = scalar_select %p35, 0, %s34
      %s37 = sadd.s32 1, %s28
      %s38 = scalar_select %p35, %s37, %s28
      %p39 = scmp.ge.s32.totalorder %s38, 2
      %s40 = scalar_select %p39, 0, %s38
      %s41 = ssub.s32 %s28, %s40
      %s42 = ssub.s32 %s29, %s36
      %s43 = sor.u32 %s41, %s42
      %p44 = scmp.eq.s32.totalorder %s43, 0
      %s46 = sadd.s32 %s45, 1
      %s47 = scalar_select %p44, %s45, %s46
      %p50 = pneg %p44
      %p51 = scmp.eq.s32.totalorder %s21, 3
      %p52 = por %p50, %p51
      %p53 = scmp.ne.s32.totalorder %s45, %s48
      %p54 = scmp.eq.s32.totalorder %s21, 0
      %p55 = por %p53, %p54
      %p56 = scmp.ne.s32.totalorder %s45, %s48
      %p57 = scmp.eq.s32.totalorder %s26, 3
      %p58 = por %p56, %p57
      %p59 = scmp.ne.s32.totalorder %s48, %s49
      %p60 = scmp.eq.s32.totalorder %s26, 0
      %p61 = por %p59, %p60
      %p62 = scmp.ne.s32.totalorder %s48, %s49
      %p63 = scmp.eq.s32.totalorder %s27, 3
      %p64 = por %p62, %p63
      %p66 = scmp.ne.s32.totalorder %s49, %s65
      %p67 = scmp.eq.s32.totalorder %s27, 0
      %p68 = por %p66, %p67
      %s69 = ssub.s32 %s29, %s36
      %p70 = scmp.eq.s32.totalorder %s69, 0
      %s72 = sadd.s32 %s71, 1
      %s73 = scalar_select %p70, %s71, %s72
      %p76 = pneg %p70
      %p77 = scmp.eq.s32.totalorder %s21, 3
      %p78 = por %p76, %p77
      %p79 = scmp.ne.s32.totalorder %s71, %s74
      %p80 = scmp.eq.s32.totalorder %s21, 0
      %p81 = por %p79, %p80
      %p82 = scmp.ne.s32.totalorder %s71, %s74
      %p83 = scmp.eq.s32.totalorder %s26, 3
      %p84 = por %p82, %p83
      %p85 = scmp.ne.s32.totalorder %s74, %s75
      %p86 = scmp.eq.s32.totalorder %s26, 0
      %p87 = por %p85, %p86
      %p88 = scmp.ne.s32.totalorder %s74, %s75
      %p89 = scmp.eq.s32.totalorder %s27, 3
      %p90 = por %p88, %p89
      %p92 = scmp.ne.s32.totalorder %s75, %s91
      %p93 = scmp.eq.s32.totalorder %s27, 0
      %p94 = por %p92, %p93
      %s95 = ssub.s32 %s28, %s40
      %p96 = scmp.eq.s32.totalorder %s95, 0
      %s98 = sadd.s32 %s97, 1
      %s99 = scalar_select %p96, %s97, %s98
      %p102 = pneg %p96
      %p103 = scmp.eq.s32.totalorder %s21, 3
      %p104 = por %p102, %p103
      %p105 = scmp.ne.s32.totalorder %s97, %s100
      %p106 = scmp.eq.s32.totalorder %s21, 0
      %p107 = por %p105, %p106
      %p108 = scmp.ne.s32.totalorder %s97, %s100
      %p109 = scmp.eq.s32.totalorder %s26, 3
      %p110 = por %p108, %p109
      %p111 = scmp.ne.s32.totalorder %s100, %s101
      %p112 = scmp.eq.s32.totalorder %s26, 0
      %p113 = por %p111, %p112
      %p114 = scmp.ne.s32.totalorder %s100, %s101
      %p115 = scmp.eq.s32.totalorder %s27, 3
      %p116 = por %p114, %p115
      %p118 = scmp.ne.s32.totalorder %s101, %s117
      %p119 = scmp.eq.s32.totalorder %s27, 0
      %p120 = por %p118, %p119
      %s122 = sadd.s32 %s121, 1
      %p125 = scmp.eq.s32.totalorder %s21, 3
      %p126 = scmp.ne.s32.totalorder %s121, %s123
      %p127 = scmp.eq.s32.totalorder %s21, 0
      %p128 = por %p126, %p127
      %p129 = scmp.ne.s32.totalorder %s121, %s123
      %p130 = scmp.eq.s32.totalorder %s26, 3
      %p131 = por %p129, %p130
      %p132 = scmp.ne.s32.totalorder %s123, %s124
      %p133 = scmp.eq.s32.totalorder %s26, 0
      %p134 = por %p132, %p133
      %p135 = scmp.ne.s32.totalorder %s123, %s124
      %p136 = scmp.eq.s32.totalorder %s27, 3
      %p137 = por %p135, %p136
      %p139 = scmp.ne.s32.totalorder %s124, %s138
      %p140 = scmp.eq.s32.totalorder %s27, 0
      %p141 = por %p139, %p140
      %s142 = ssub.s32 %s28, %s40
      %p143 = scmp.eq.s32.totalorder %s142, 0
      %s145 = sadd.s32 %s144, 1
      %s146 = scalar_select %p143, %s144, %s145
      %p149 = pneg %p143
      %p150 = scmp.eq.s32.totalorder %s21, 3
      %p151 = por %p149, %p150
      %p152 = scmp.ne.s32.totalorder %s144, %s147
      %p153 = scmp.eq.s32.totalorder %s21, 0
      %p154 = por %p152, %p153
      %p155 = scmp.ne.s32.totalorder %s144, %s147
      %p156 = scmp.eq.s32.totalorder %s26, 3
      %p157 = por %p155, %p156
      %p158 = scmp.ne.s32.totalorder %s147, %s148
      %p159 = scmp.eq.s32.totalorder %s26, 0
      %p160 = por %p158, %p159
      %p161 = scmp.ne.s32.totalorder %s147, %s148
      %p162 = scmp.eq.s32.totalorder %s27, 3
      %p163 = por %p161, %p162
      %p165 = scmp.ne.s32.totalorder %s148, %s164
      %p166 = scmp.eq.s32.totalorder %s27, 0
      %p167 = por %p165, %p166
      %s168 = ssub.s32 %s28, %s40
      %p169 = scmp.eq.s32.totalorder %s168, 0
      %s171 = sadd.s32 %s170, 1
      %s172 = scalar_select %p169, %s170, %s171
      %p175 = pneg %p169
      %p176 = scmp.eq.s32.totalorder %s21, 3
      %p177 = por %p175, %p176
      %p178 = scmp.ne.s32.totalorder %s170, %s173
      %p179 = scmp.eq.s32.totalorder %s21, 0
      %p180 = por %p178, %p179
      %p181 = scmp.ne.s32.totalorder %s170, %s173
      %p182 = scmp.eq.s32.totalorder %s26, 3
      %p183 = por %p181, %p182
      %p184 = scmp.ne.s32.totalorder %s173, %s174
      %p185 = scmp.eq.s32.totalorder %s26, 0
      %p186 = por %p184, %p185
      %p187 = scmp.ne.s32.totalorder %s173, %s174
      %p188 = scmp.eq.s32.totalorder %s27, 3
      %p189 = por %p187, %p188
      %p191 = scmp.ne.s32.totalorder %s174, %s190
      %p192 = scmp.eq.s32.totalorder %s27, 0
      %p193 = por %p191, %p192
      %p194 = scmp.le.s32.totalorder 1, %s21
      %p195 = scmp.lt.s32.totalorder %s21, 5
      %p196 = pnand %p194, %p195
      %p197 = pneg %p196
      // Predicated region
      $region9: #{tpu_custom_call.1} parent=5 // pred_check
        _
      $region10: #{tpu_custom_call.1} parent=5 // pred_check_branch
        %199 = sbr.rel (%p196) target = $region12
      $region11: #{tpu_custom_call.1} parent=5 // pred_region
        %s200 = ssub.s32 %s21, 1
        // Predicated region
        $region13: #{tpu_custom_call.1} parent=11 // pred_check
          %p201 = pneg %p134
        $region14: #{tpu_custom_call.1} parent=11 // pred_check_branch
          %203 = sbr.rel (%p201) target = $region16
        $region15: #{tpu_custom_call.1} parent=11 // pred_region
          %s205 = ssub.s32 2048, 2048
          %206 = vsyncadd [#allocation9], %s205
          %s207 = sshll.u32 [#allocation8], 4
          %s208 = int_to_ptr.vmem [resolvable:$true] %s207
          %213 = dma.hbm_to_vmem [thread:$0]  %s3, 2048, %s208, [#allocation9], 128, 128, 8
        $region16: #{tpu_custom_call.1} parent=11 // pred_fallthru
          _
      $region12: #{tpu_custom_call.1} parent=5 // pred_fallthru
        _
      %p214 = scmp.lt.s32.totalorder %s21, 4
      // Predicated region
      $region17: #{tpu_custom_call.1} parent=5 // pred_check
        %p215 = pneg %p214
      $region18: #{tpu_custom_call.1} parent=5 // pred_check_branch
        %217 = sbr.rel (%p215) target = $region20
      $region19: #{tpu_custom_call.1} parent=5 // pred_region
        // Predicated region
        $region21: #{tpu_custom_call.1} parent=19 // pred_check
          %p218 = pneg %p55
        $region22: #{tpu_custom_call.1} parent=19 // pred_check_branch
          %220 = sbr.rel (%p218) target = $region24
        $region23: #{tpu_custom_call.1} parent=19 // pred_region
          %s221 = sand.u32 %s21, 1
          %s222 = scalar_lea.sflag [#allocation3], %s221
          %s223 = sand.u32 %s45, 1
          %s224 = smul.addr %s223, 512
          %s225 = scalar_lea.vmem [#allocation2], %s224
          %s226 = smul.u32 32, %s28
          %s227 = smul.u32 2, %s29
          %s229 = ssub.s32 8192, 8192
          %230 = vsyncadd %s222, %s229
          %s231 = smul.addr %s226, 4
          %s232 = sadd.s32 %s227, %s231
          %s233 = smul.addr %s232, 128
          %s234 = scalar_lea.hbm %s0, %s233
          %s235 = sshll.u32 %s225, 4
          %s236 = int_to_ptr.vmem [resolvable:$true] %s235
          %241 = dma.hbm_to_vmem [thread:$0]  %s234, 8192, %s236, %s222, 512, 256, 16
        $region24: #{tpu_custom_call.1} parent=19 // pred_fallthru
          _
        // Predicated region
        $region25: #{tpu_custom_call.1} parent=19 // pred_check
          %p242 = pneg %p81
        $region26: #{tpu_custom_call.1} parent=19 // pred_check_branch
          %244 = sbr.rel (%p242) target = $region28
        $region27: #{tpu_custom_call.1} parent=19 // pred_region
          %s245 = sand.u32 %s21, 1
          %s246 = scalar_lea.sflag [#allocation6], %s245
          %s247 = sand.u32 %s71, 1
          %s248 = smul.addr %s247, 256
          %s249 = scalar_lea.vmem [#allocation5], %s248
          %s250 = smul.u32 32, %s29
          %s252 = ssub.s32 4096, 4096
          %253 = vsyncadd %s246, %s252
          %s254 = smul.addr %s250, 128
          %s255 = scalar_lea.hbm %s1, %s254
          %s256 = sshll.u32 %s249, 4
          %s257 = int_to_ptr.vmem [resolvable:$true] %s256
          %262 = dma.hbm_to_vmem [thread:$0]  %s255, 4096, %s257, %s246, 128, 128, 8
        $region28: #{tpu_custom_call.1} parent=19 // pred_fallthru
          _
        // Predicated region
        $region29: #{tpu_custom_call.1} parent=19 // pred_check
          %p263 = pneg %p107
        $region30: #{tpu_custom_call.1} parent=19 // pred_check_branch
          %265 = sbr.rel (%p263) target = $region32
        $region31: #{tpu_custom_call.1} parent=19 // pred_region
          %s266 = sand.u32 %s21, 1
          %s267 = scalar_lea.sflag [#allocation6], %s266
          %s268 = sand.u32 %s97, 1
          %s269 = smul.addr %s268, 256
          %s270 = scalar_lea.vmem [#allocation7], %s269
          %s271 = smul.u32 32, %s28
          %s273 = ssub.s32 4096, 4096
          %274 = vsyncadd %s267, %s273
          %s275 = smul.addr %s271, 128
          %s276 = scalar_lea.hbm %s2, %s275
          %s277 = sshll.u32 %s270, 4
          %s278 = int_to_ptr.vmem [resolvable:$true] %s277
          %283 = dma.hbm_to_vmem [thread:$0]  %s276, 4096, %s278, %s267, 128, 128, 8
        $region32: #{tpu_custom_call.1} parent=19 // pred_fallthru
          _
        // Predicated region
        $region33: #{tpu_custom_call.1} parent=19 // pred_check
          %p284 = pneg %p154
        $region34: #{tpu_custom_call.1} parent=19 // pred_check_branch
          %286 = sbr.rel (%p284) target = $region36
        $region35: #{tpu_custom_call.1} parent=19 // pred_region
          %s287 = sand.u32 %s21, 1
          %s288 = scalar_lea.sflag [#allocation3], %s287
          %s289 = sand.u32 %s144, 1
          %s290 = smul.addr %s289, 256
          %s291 = scalar_lea.vmem [#allocation10], %s290
          %s292 = smul.u32 32, %s28
          %s294 = ssub.s32 4096, 4096
          %295 = vsyncadd %s288, %s294
          %s296 = smul.addr %s292, 128
          %s297 = scalar_lea.hbm %s4, %s296
          %s298 = sshll.u32 %s291, 4
          %s299 = int_to_ptr.vmem [resolvable:$true] %s298
          %304 = dma.hbm_to_vmem [thread:$0]  %s297, 4096, %s299, %s288, 128, 128, 8
        $region36: #{tpu_custom_call.1} parent=19 // pred_fallthru
          _
      $region20: #{tpu_custom_call.1} parent=5 // pred_fallthru
        _
      %p305 = scmp.le.s32.totalorder 1, %s21
      %p306 = scmp.lt.s32.totalorder %s21, 5
      %p307 = pnand %p305, %p306
      %p308 = pneg %p307
      // Predicated region
      $region37: #{tpu_custom_call.1} parent=5 // pred_check
        _
      $region38: #{tpu_custom_call.1} parent=5 // pred_check_branch
        %310 = sbr.rel (%p307) target = $region40
      $region39: #{tpu_custom_call.1} parent=5 // pred_region
        %s311 = ssub.s32 %s21, 1
        %s312 = sand.u32 %s26, 1
        %s313 = scalar_lea.sflag [#allocation3], %s312
        %s314 = sand.u32 %s48, 1
        %s315 = smul.addr %s314, 512
        %s316 = scalar_lea.vmem [#allocation2], %s315
        // Predicated region
        $region41: #{tpu_custom_call.1} parent=39 // pred_check
          %p317 = pneg %p61
        $region42: #{tpu_custom_call.1} parent=39 // pred_check_branch
          %319 = sbr.rel (%p317) target = $region44
        $region43: #{tpu_custom_call.1} parent=39 // pred_region
          %320 = dma.done %s313, 8192
        $region44: #{tpu_custom_call.1} parent=39 // pred_fallthru
          _
        %s321 = sand.u32 %s26, 1
        %s322 = scalar_lea.sflag [#allocation6], %s321
        %s323 = sand.u32 %s74, 1
        %s324 = smul.addr %s323, 256
        %s325 = scalar_lea.vmem [#allocation5], %s324
        // Predicated region
        $region45: #{tpu_custom_call.1} parent=39 // pred_check
          %p326 = pneg %p87
        $region46: #{tpu_custom_call.1} parent=39 // pred_check_branch
          %328 = sbr.rel (%p326) target = $region48
        $region47: #{tpu_custom_call.1} parent=39 // pred_region
          %329 = dma.done %s322, 4096
        $region48: #{tpu_custom_call.1} parent=39 // pred_fallthru
          _
        %s330 = sand.u32 %s26, 1
        %s331 = scalar_lea.sflag [#allocation6], %s330
        %s332 = sand.u32 %s100, 1
        %s333 = smul.addr %s332, 256
        %s334 = scalar_lea.vmem [#allocation7], %s333
        // Predicated region
        $region49: #{tpu_custom_call.1} parent=39 // pred_check
          %p335 = pneg %p113
        $region50: #{tpu_custom_call.1} parent=39 // pred_check_branch
          %337 = sbr.rel (%p335) target = $region52
        $region51: #{tpu_custom_call.1} parent=39 // pred_region
          %338 = dma.done %s331, 4096
        $region52: #{tpu_custom_call.1} parent=39 // pred_fallthru
          _
        // Predicated region
        $region53: #{tpu_custom_call.1} parent=39 // pred_check
          %p339 = pneg %p134
        $region54: #{tpu_custom_call.1} parent=39 // pred_check_branch
          %341 = sbr.rel (%p339) target = $region56
        $region55: #{tpu_custom_call.1} parent=39 // pred_region
          %342 = dma.done [#allocation9], 2048
        $region56: #{tpu_custom_call.1} parent=39 // pred_fallthru
          _
        %s343 = sand.u32 %s26, 1
        %s344 = scalar_lea.sflag [#allocation3], %s343
        %s345 = sand.u32 %s147, 1
        %s346 = smul.addr %s345, 256
        %s347 = scalar_lea.vmem [#allocation10], %s346
        // Predicated region
        $region57: #{tpu_custom_call.1} parent=39 // pred_check
          %p348 = pneg %p160
        $region58: #{tpu_custom_call.1} parent=39 // pred_check_branch
          %350 = sbr.rel (%p348) target = $region60
        $region59: #{tpu_custom_call.1} parent=39 // pred_region
          %351 = dma.done %s344, 4096
        $region60: #{tpu_custom_call.1} parent=39 // pred_fallthru
          _
        %s352 = sand.u32 %s26, 1
        %s353 = scalar_lea.sflag [#allocation3], %s352
        %s354 = sand.u32 %s48, 1
        %s355 = smul.addr %s354, 512
        %s356 = scalar_lea.vmem [#allocation2], %s355
        %p357 = pneg %p61
        %p358 = pneg %p58
        %s359 = sand.u32 %s26, 1
        %s360 = scalar_lea.sflag [#allocation6], %s359
        %s361 = sand.u32 %s74, 1
        %s362 = smul.addr %s361, 256
        %s363 = scalar_lea.vmem [#allocation5], %s362
        %p364 = pneg %p87
        %p365 = pneg %p84
        %s366 = sand.u32 %s26, 1
        %s367 = scalar_lea.sflag [#allocation6], %s366
        %s368 = sand.u32 %s100, 1
        %s369 = smul.addr %s368, 256
        %s370 = scalar_lea.vmem [#allocation7], %s369
        %p371 = pneg %p113
        %p372 = pneg %p110
        %p373 = pneg %p134
        %p374 = pneg %p131
        %s375 = sand.u32 %s26, 1
        %s376 = scalar_lea.sflag [#allocation3], %s375
        %s377 = sand.u32 %s147, 1
        %s378 = smul.addr %s377, 256
        %s379 = scalar_lea.vmem [#allocation10], %s378
        %p380 = pneg %p160
        %p381 = pneg %p157
        %p382 = pneg %p186
        %p383 = pneg %p183
        %s384 = sand.u32 %s173, 1
        %s385 = scalar_lea.sflag [#allocation4], %s384
        %s386 = sand.u32 %s173, 1
        %s387 = smul.addr %s386, 256
        %s388 = scalar_lea.vmem [#allocation11], %s387
        %s389 = smul.u32 32, %s30
        %s390 = smul.u32 2, %s31
        %s391 = smul.u32 32, %s31
        %s392 = smul.u32 32, %s30
        %s393 = smul.u32 32, %s30
        %s394 = smul.u32 32, %s30
        %p395 = scmp.eq.s32.totalorder %s31, 0
        // Predicated region
        $region61: #{tpu_custom_call.1} parent=39 // pred_check
          %p396 = pneg %p395
        $region62: #{tpu_custom_call.1} parent=39 // pred_check_branch
          %398 = sbr.rel (%p396) target = $region64
        $region63: #{tpu_custom_call.1} parent=39 // pred_region
          %399 = vst [vmem:[%s388] sm:$0xff] 0.0
          %400 = vst [vmem:[%s388 + $0x8] sm:$0xff] 0.0
          %401 = vst [vmem:[%s388 + $0x10] sm:$0xff] 0.0
          %402 = vst [vmem:[%s388 + $0x18] sm:$0xff] 0.0
          %403 = vst [vmem:[%s388 + $0x20] sm:$0xff] 0.0
          %404 = vst [vmem:[%s388 + $0x28] sm:$0xff] 0.0
          %405 = vst [vmem:[%s388 + $0x30] sm:$0xff] 0.0
          %406 = vst [vmem:[%s388 + $0x38] sm:$0xff] 0.0
          %407 = vst [vmem:[%s388 + $0x40] sm:$0xff] 0.0
          %408 = vst [vmem:[%s388 + $0x48] sm:$0xff] 0.0
          %409 = vst [vmem:[%s388 + $0x50] sm:$0xff] 0.0
          %410 = vst [vmem:[%s388 + $0x58] sm:$0xff] 0.0
          %411 = vst [vmem:[%s388 + $0x60] sm:$0xff] 0.0
          %412 = vst [vmem:[%s388 + $0x68] sm:$0xff] 0.0
          %413 = vst [vmem:[%s388 + $0x70] sm:$0xff] 0.0
          %414 = vst [vmem:[%s388 + $0x78] sm:$0xff] 0.0
          %415 = vst [vmem:[%s388 + $0x80] sm:$0xff] 0.0
          %416 = vst [vmem:[%s388 + $0x88] sm:$0xff] 0.0
          %417 = vst [vmem:[%s388 + $0x90] sm:$0xff] 0.0
          %418 = vst [vmem:[%s388 + $0x98] sm:$0xff] 0.0
          %419 = vst [vmem:[%s388 + $0xa0] sm:$0xff] 0.0
          %420 = vst [vmem:[%s388 + $0xa8] sm:$0xff] 0.0
          %421 = vst [vmem:[%s388 + $0xb0] sm:$0xff] 0.0
          %422 = vst [vmem:[%s388 + $0xb8] sm:$0xff] 0.0
          %423 = vst [vmem:[%s388 + $0xc0] sm:$0xff] 0.0
          %424 = vst [vmem:[%s388 + $0xc8] sm:$0xff] 0.0
          %425 = vst [vmem:[%s388 + $0xd0] sm:$0xff] 0.0
          %426 = vst [vmem:[%s388 + $0xd8] sm:$0xff] 0.0
          %427 = vst [vmem:[%s388 + $0xe0] sm:$0xff] 0.0
          %428 = vst [vmem:[%s388 + $0xe8] sm:$0xff] 0.0
          %429 = vst [vmem:[%s388 + $0xf0] sm:$0xff] 0.0
          %430 = vst [vmem:[%s388 + $0xf8] sm:$0xff] 0.0
        $region64: #{tpu_custom_call.1} parent=39 // pred_fallthru
          _
        %v431 = vld [vmem:[%s388] sm:$0xff]
        %v432 = vld [vmem:[%s388 + $0x8] sm:$0xff]
        %v433 = vld [vmem:[%s388 + $0x10] sm:$0xff]
        %v434 = vld [vmem:[%s388 + $0x18] sm:$0xff]
        %v435 = vld [vmem:[%s388 + $0x20] sm:$0xff]
        %v436 = vld [vmem:[%s388 + $0x28] sm:$0xff]
        %v437 = vld [vmem:[%s388 + $0x30] sm:$0xff]
        %v438 = vld [vmem:[%s388 + $0x38] sm:$0xff]
        %v439 = vld [vmem:[%s388 + $0x40] sm:$0xff]
        %v440 = vld [vmem:[%s388 + $0x48] sm:$0xff]
        %v441 = vld [vmem:[%s388 + $0x50] sm:$0xff]
        %v442 = vld [vmem:[%s388 + $0x58] sm:$0xff]
        %v443 = vld [vmem:[%s388 + $0x60] sm:$0xff]
        %v444 = vld [vmem:[%s388 + $0x68] sm:$0xff]
        %v445 = vld [vmem:[%s388 + $0x70] sm:$0xff]
        %v446 = vld [vmem:[%s388 + $0x78] sm:$0xff]
        %v447 = vld [vmem:[%s388 + $0x80] sm:$0xff]
        %v448 = vld [vmem:[%s388 + $0x88] sm:$0xff]
        %v449 = vld [vmem:[%s388 + $0x90] sm:$0xff]
        %v450 = vld [vmem:[%s388 + $0x98] sm:$0xff]
        %v451 = vld [vmem:[%s388 + $0xa0] sm:$0xff]
        %v452 = vld [vmem:[%s388 + $0xa8] sm:$0xff]
        %v453 = vld [vmem:[%s388 + $0xb0] sm:$0xff]
        %v454 = vld [vmem:[%s388 + $0xb8] sm:$0xff]
        %v455 = vld [vmem:[%s388 + $0xc0] sm:$0xff]
        %v456 = vld [vmem:[%s388 + $0xc8] sm:$0xff]
        %v457 = vld [vmem:[%s388 + $0xd0] sm:$0xff]
        %v458 = vld [vmem:[%s388 + $0xd8] sm:$0xff]
        %v459 = vld [vmem:[%s388 + $0xe0] sm:$0xff]
        %v460 = vld [vmem:[%s388 + $0xe8] sm:$0xff]
        %v461 = vld [vmem:[%s388 + $0xf0] sm:$0xff]
        %v462 = vld [vmem:[%s388 + $0xf8] sm:$0xff]
        %v463 = vld [vmem:[%s316] sm:$0xff]
        %v464 = vld [vmem:[%s316 + $0x8] sm:$0xff]
        %v465 = vld [vmem:[%s316 + $0x10] sm:$0xff]
        %v466 = vld [vmem:[%s316 + $0x18] sm:$0xff]
        %v467 = vld [vmem:[%s316 + $0x20] sm:$0xff]
        %v468 = vld [vmem:[%s316 + $0x28] sm:$0xff]
        %v469 = vld [vmem:[%s316 + $0x30] sm:$0xff]
        %v470 = vld [vmem:[%s316 + $0x38] sm:$0xff]
        %v471 = vld [vmem:[%s316 + $0x40] sm:$0xff]
        %v472 = vld [vmem:[%s316 + $0x48] sm:$0xff]
        %v473 = vld [vmem:[%s316 + $0x50] sm:$0xff]
        %v474 = vld [vmem:[%s316 + $0x58] sm:$0xff]
        %v475 = vld [vmem:[%s316 + $0x60] sm:$0xff]
        %v476 = vld [vmem:[%s316 + $0x68] sm:$0xff]
        %v477 = vld [vmem:[%s316 + $0x70] sm:$0xff]
        %v478 = vld [vmem:[%s316 + $0x78] sm:$0xff]
        %v479 = vld [vmem:[%s316 + $0x80] sm:$0xff]
        %v480 = vld [vmem:[%s316 + $0x88] sm:$0xff]
        %v481 = vld [vmem:[%s316 + $0x90] sm:$0xff]
        %v482 = vld [vmem:[%s316 + $0x98] sm:$0xff]
        %v483 = vld [vmem:[%s316 + $0xa0] sm:$0xff]
        %v484 = vld [vmem:[%s316 + $0xa8] sm:$0xff]
        %v485 = vld [vmem:[%s316 + $0xb0] sm:$0xff]
        %v486 = vld [vmem:[%s316 + $0xb8] sm:$0xff]
        %v487 = vld [vmem:[%s316 + $0xc0] sm:$0xff]
        %v488 = vld [vmem:[%s316 + $0xc8] sm:$0xff]
        %v489 = vld [vmem:[%s316 + $0xd0] sm:$0xff]
        %v490 = vld [vmem:[%s316 + $0xd8] sm:$0xff]
        %v491 = vld [vmem:[%s316 + $0xe0] sm:$0xff]
        %v492 = vld [vmem:[%s316 + $0xe8] sm:$0xff]
        %v493 = vld [vmem:[%s316 + $0xf0] sm:$0xff]
        %v494 = vld [vmem:[%s316 + $0xf8] sm:$0xff]
        %v495 = vld [vmem:[%s316 + $0x100] sm:$0xff]
        %v496 = vld [vmem:[%s316 + $0x108] sm:$0xff]
        %v497 = vld [vmem:[%s316 + $0x110] sm:$0xff]
        %v498 = vld [vmem:[%s316 + $0x118] sm:$0xff]
        %v499 = vld [vmem:[%s316 + $0x120] sm:$0xff]
        %v500 = vld [vmem:[%s316 + $0x128] sm:$0xff]
        %v501 = vld [vmem:[%s316 + $0x130] sm:$0xff]
        %v502 = vld [vmem:[%s316 + $0x138] sm:$0xff]
        %v503 = vld [vmem:[%s316 + $0x140] sm:$0xff]
        %v504 = vld [vmem:[%s316 + $0x148] sm:$0xff]
        %v505 = vld [vmem:[%s316 + $0x150] sm:$0xff]
        %v506 = vld [vmem:[%s316 + $0x158] sm:$0xff]
        %v507 = vld [vmem:[%s316 + $0x160] sm:$0xff]
        %v508 = vld [vmem:[%s316 + $0x168] sm:$0xff]
        %v509 = vld [vmem:[%s316 + $0x170] sm:$0xff]
        %v510 = vld [vmem:[%s316 + $0x178] sm:$0xff]
        %v511 = vld [vmem:[%s316 + $0x180] sm:$0xff]
        %v512 = vld [vmem:[%s316 + $0x188] sm:$0xff]
        %v513 = vld [vmem:[%s316 + $0x190] sm:$0xff]
        %v514 = vld [vmem:[%s316 + $0x198] sm:$0xff]
        %v515 = vld [vmem:[%s316 + $0x1a0] sm:$0xff]
        %v516 = vld [vmem:[%s316 + $0x1a8] sm:$0xff]
        %v517 = vld [vmem:[%s316 + $0x1b0] sm:$0xff]
        %v518 = vld [vmem:[%s316 + $0x1b8] sm:$0xff]
        %v519 = vld [vmem:[%s316 + $0x1c0] sm:$0xff]
        %v520 = vld [vmem:[%s316 + $0x1c8] sm:$0xff]
        %v521 = vld [vmem:[%s316 + $0x1d0] sm:$0xff]
        %v522 = vld [vmem:[%s316 + $0x1d8] sm:$0xff]
        %v523 = vld [vmem:[%s316 + $0x1e0] sm:$0xff]
        %v524 = vld [vmem:[%s316 + $0x1e8] sm:$0xff]
        %v525 = vld [vmem:[%s316 + $0x1f0] sm:$0xff]
        %v526 = vld [vmem:[%s316 + $0x1f8] sm:$0xff]
        %v527 = vld [vmem:[%s325] sm:$0xff]
        %v528 = vld [vmem:[%s325 + $0x8] sm:$0xff]
        %v529 = vld [vmem:[%s325 + $0x10] sm:$0xff]
        %v530 = vld [vmem:[%s325 + $0x18] sm:$0xff]
        %v531 = vld [vmem:[%s325 + $0x20] sm:$0xff]
        %v532 = vld [vmem:[%s325 + $0x28] sm:$0xff]
        %v533 = vld [vmem:[%s325 + $0x30] sm:$0xff]
        %v534 = vld [vmem:[%s325 + $0x38] sm:$0xff]
        %v535 = vld [vmem:[%s325 + $0x40] sm:$0xff]
        %v536 = vld [vmem:[%s325 + $0x48] sm:$0xff]
        %v537 = vld [vmem:[%s325 + $0x50] sm:$0xff]
        %v538 = vld [vmem:[%s325 + $0x58] sm:$0xff]
        %v539 = vld [vmem:[%s325 + $0x60] sm:$0xff]
        %v540 = vld [vmem:[%s325 + $0x68] sm:$0xff]
        %v541 = vld [vmem:[%s325 + $0x70] sm:$0xff]
        %v542 = vld [vmem:[%s325 + $0x78] sm:$0xff]
        %v543 = vld [vmem:[%s325 + $0x80] sm:$0xff]
        %v544 = vld [vmem:[%s325 + $0x88] sm:$0xff]
        %v545 = vld [vmem:[%s325 + $0x90] sm:$0xff]
        %v546 = vld [vmem:[%s325 + $0x98] sm:$0xff]
        %v547 = vld [vmem:[%s325 + $0xa0] sm:$0xff]
        %v548 = vld [vmem:[%s325 + $0xa8] sm:$0xff]
        %v549 = vld [vmem:[%s325 + $0xb0] sm:$0xff]
        %v550 = vld [vmem:[%s325 + $0xb8] sm:$0xff]
        %v551 = vld [vmem:[%s325 + $0xc0] sm:$0xff]
        %v552 = vld [vmem:[%s325 + $0xc8] sm:$0xff]
        %v553 = vld [vmem:[%s325 + $0xd0] sm:$0xff]
        %v554 = vld [vmem:[%s325 + $0xd8] sm:$0xff]
        %v555 = vld [vmem:[%s325 + $0xe0] sm:$0xff]
        %v556 = vld [vmem:[%s325 + $0xe8] sm:$0xff]
        %v557 = vld [vmem:[%s325 + $0xf0] sm:$0xff]
        %v558 = vld [vmem:[%s325 + $0xf8] sm:$0xff]
        %559 = vmatprep.subr.mxu0 0.0
        %560 = vmatpush1.msra.mxu0 %v542
        %561 = vmatprep.subr.mxu0 0.0
        %562 = vmatpush1.msra.mxu0 %v541
        %563 = vmatprep.subr.mxu0 0.0
        %564 = vmatpush1.msra.mxu0 %v540
        %565 = vmatprep.subr.mxu0 0.0
        %566 = vmatpush1.msra.mxu0 %v539
        %567 = vmatprep.subr.mxu0 0.0
        %568 = vmatpush1.msra.mxu0 %v538
        %569 = vmatprep.subr.mxu0 0.0
        %570 = vmatpush1.msra.mxu0 %v537
        %571 = vmatprep.subr.mxu0 0.0
        %572 = vmatpush1.msra.mxu0 %v536
        %573 = vmatprep.subr.mxu0 0.0
        %574 = vmatpush1.msra.mxu0 %v535
        %575 = vmatprep.subr.mxu0 0.0
        %576 = vmatpush1.msra.mxu0 %v534
        %577 = vmatprep.subr.mxu0 0.0
        %578 = vmatpush1.msra.mxu0 %v533
        %579 = vmatprep.subr.mxu0 0.0
        %580 = vmatpush1.msra.mxu0 %v532
        %581 = vmatprep.subr.mxu0 0.0
        %582 = vmatpush1.msra.mxu0 %v531
        %583 = vmatprep.subr.mxu0 0.0
        %584 = vmatpush1.msra.mxu0 %v530
        %585 = vmatprep.subr.mxu0 0.0
        %586 = vmatpush1.msra.mxu0 %v529
        %587 = vmatprep.subr.mxu0 0.0
        %588 = vmatpush1.msra.mxu0 %v528
        %589 = vmatprep.subr.mxu0 0.0
        %590 = vmatpush1.msra.mxu0 %v527
        %591 = vmatprep.subr.mxu0 0.0
        %592 = vmatpush2.msra.mxu0 %v558
        %593 = vmatprep.subr.mxu0 0.0
        %594 = vmatpush2.msra.mxu0 %v557
        %595 = vmatprep.subr.mxu0 0.0
        %596 = vmatpush2.msra.mxu0 %v556
        %597 = vmatprep.subr.mxu0 0.0
        %598 = vmatpush2.msra.mxu0 %v555
        %599 = vmatprep.subr.mxu0 0.0
        %600 = vmatpush2.msra.mxu0 %v554
        %601 = vmatprep.subr.mxu0 0.0
        %602 = vmatpush2.msra.mxu0 %v553
        %603 = vmatprep.subr.mxu0 0.0
        %604 = vmatpush2.msra.mxu0 %v552
        %605 = vmatprep.subr.mxu0 0.0
        %606 = vmatpush2.msra.mxu0 %v551
        %607 = vmatprep.subr.mxu0 0.0
        %608 = vmatpush2.msra.mxu0 %v550
        %609 = vmatprep.subr.mxu0 0.0
        %610 = vmatpush2.msra.mxu0 %v549
        %611 = vmatprep.subr.mxu0 0.0
        %612 = vmatpush2.msra.mxu0 %v548
        %613 = vmatprep.subr.mxu0 0.0
        %614 = vmatpush2.msra.mxu0 %v547
        %615 = vmatprep.subr.mxu0 0.0
        %616 = vmatpush2.msra.mxu0 %v546
        %617 = vmatprep.subr.mxu0 0.0
        %618 = vmatpush2.msra.mxu0 %v545
        %619 = vmatprep.subr.mxu0 0.0
        %620 = vmatpush2.msra.mxu0 %v544
        %621 = vmatprep.subr.mxu0 0.0
        %622 = vmatpush2.msra.mxu0 %v543
        %623 = vmatprep.mubr.f32.mxu0 %v464
        %624 = vmatmul.mubr.f32.gmra.mxu0 %v463
        %v625 = vpop.f32.mrf.mxu0
        %v626 = vadd.f32 0.0, %v625
        %v627 = vpop.f32.mrf.mxu0
        %628 = vmatprep.mubr.f32.mxu0 %v466
        %629 = vmatmul.mubr.f32.gmra.mxu0 %v465
        %v630 = vpop.f32.mrf.mxu0
        %v631 = vadd.f32 0.0, %v630
        %v632 = vpop.f32.mrf.mxu0
        %633 = vmatprep.mubr.f32.mxu0 %v468
        %634 = vmatmul.mubr.f32.gmra.mxu0 %v467
        %v635 = vpop.f32.mrf.mxu0
        %v636 = vadd.f32 0.0, %v635
        %v637 = vpop.f32.mrf.mxu0
        %638 = vmatprep.mubr.f32.mxu0 %v470
        %639 = vmatmul.mubr.f32.gmra.mxu0 %v469
        %v640 = vpop.f32.mrf.mxu0
        %v641 = vadd.f32 0.0, %v640
        %v642 = vpop.f32.mrf.mxu0
        %643 = vmatprep.mubr.f32.mxu0 %v472
        %644 = vmatmul.mubr.f32.gmra.mxu0 %v471
        %v645 = vpop.f32.mrf.mxu0
        %v646 = vadd.f32 0.0, %v645
        %v647 = vpop.f32.mrf.mxu0
        %648 = vmatprep.mubr.f32.mxu0 %v474
        %649 = vmatmul.mubr.f32.gmra.mxu0 %v473
        %v650 = vpop.f32.mrf.mxu0
        %v651 = vadd.f32 0.0, %v650
        %v652 = vpop.f32.mrf.mxu0
        %653 = vmatprep.mubr.f32.mxu0 %v476
        %654 = vmatmul.mubr.f32.gmra.mxu0 %v475
        %v655 = vpop.f32.mrf.mxu0
        %v656 = vadd.f32 0.0, %v655
        %v657 = vpop.f32.mrf.mxu0
        %658 = vmatprep.mubr.f32.mxu0 %v478
        %659 = vmatmul.mubr.f32.gmra.mxu0 %v477
        %v660 = vpop.f32.mrf.mxu0
        %v661 = vadd.f32 0.0, %v660
        %v662 = vpop.f32.mrf.mxu0
        %663 = vmatprep.mubr.f32.mxu0 %v480
        %664 = vmatmul.mubr.f32.gmra.mxu0 %v479
        %v665 = vpop.f32.mrf.mxu0
        %v666 = vadd.f32 0.0, %v665
        %v667 = vpop.f32.mrf.mxu0
        %668 = vmatprep.mubr.f32.mxu0 %v482
        %669 = vmatmul.mubr.f32.gmra.mxu0 %v481
        %v670 = vpop.f32.mrf.mxu0
        %v671 = vadd.f32 0.0, %v670
        %v672 = vpop.f32.mrf.mxu0
        %673 = vmatprep.mubr.f32.mxu0 %v484
        %674 = vmatmul.mubr.f32.gmra.mxu0 %v483
        %v675 = vpop.f32.mrf.mxu0
        %v676 = vadd.f32 0.0, %v675
        %v677 = vpop.f32.mrf.mxu0
        %678 = vmatprep.mubr.f32.mxu0 %v486
        %679 = vmatmul.mubr.f32.gmra.mxu0 %v485
        %v680 = vpop.f32.mrf.mxu0
        %v681 = vadd.f32 0.0, %v680
        %v682 = vpop.f32.mrf.mxu0
        %683 = vmatprep.mubr.f32.mxu0 %v488
        %684 = vmatmul.mubr.f32.gmra.mxu0 %v487
        %v685 = vpop.f32.mrf.mxu0
        %v686 = vadd.f32 0.0, %v685
        %v687 = vpop.f32.mrf.mxu0
        %688 = vmatprep.mubr.f32.mxu0 %v490
        %689 = vmatmul.mubr.f32.gmra.mxu0 %v489
        %v690 = vpop.f32.mrf.mxu0
        %v691 = vadd.f32 0.0, %v690
        %v692 = vpop.f32.mrf.mxu0
        %693 = vmatprep.mubr.f32.mxu0 %v492
        %694 = vmatmul.mubr.f32.gmra.mxu0 %v491
        %v695 = vpop.f32.mrf.mxu0
        %v696 = vadd.f32 0.0, %v695
        %v697 = vpop.f32.mrf.mxu0
        %698 = vmatprep.mubr.f32.mxu0 %v494
        %699 = vmatmul.mubr.f32.gmra.mxu0 %v493
        %v700 = vpop.f32.mrf.mxu0
        %v701 = vadd.f32 0.0, %v700
        %v702 = vpop.f32.mrf.mxu0
        %703 = vmatprep.mubr.f32.mxu0 %v496
        %704 = vmatmul.mubr.f32.gmra.mxu0 %v495
        %v705 = vpop.f32.mrf.mxu0
        %v706 = vadd.f32 0.0, %v705
        %v707 = vpop.f32.mrf.mxu0
        %708 = vmatprep.mubr.f32.mxu0 %v498
        %709 = vmatmul.mubr.f32.gmra.mxu0 %v497
        %v710 = vpop.f32.mrf.mxu0
        %v711 = vadd.f32 0.0, %v710
        %v712 = vpop.f32.mrf.mxu0
        %713 = vmatprep.mubr.f32.mxu0 %v500
        %714 = vmatmul.mubr.f32.gmra.mxu0 %v499
        %v715 = vpop.f32.mrf.mxu0
        %v716 = vadd.f32 0.0, %v715
        %v717 = vpop.f32.mrf.mxu0
        %718 = vmatprep.mubr.f32.mxu0 %v502
        %719 = vmatmul.mubr.f32.gmra.mxu0 %v501
        %v720 = vpop.f32.mrf.mxu0
        %v721 = vadd.f32 0.0, %v720
        %v722 = vpop.f32.mrf.mxu0
        %723 = vmatprep.mubr.f32.mxu0 %v504
        %724 = vmatmul.mubr.f32.gmra.mxu0 %v503
        %v725 = vpop.f32.mrf.mxu0
        %v726 = vadd.f32 0.0, %v725
        %v727 = vpop.f32.mrf.mxu0
        %728 = vmatprep.mubr.f32.mxu0 %v506
        %729 = vmatmul.mubr.f32.gmra.mxu0 %v505
        %v730 = vpop.f32.mrf.mxu0
        %v731 = vadd.f32 0.0, %v730
        %v732 = vpop.f32.mrf.mxu0
        %733 = vmatprep.mubr.f32.mxu0 %v508
        %734 = vmatmul.mubr.f32.gmra.mxu0 %v507
        %v735 = vpop.f32.mrf.mxu0
        %v736 = vadd.f32 0.0, %v735
        %v737 = vpop.f32.mrf.mxu0
        %738 = vmatprep.mubr.f32.mxu0 %v510
        %739 = vmatmul.mubr.f32.gmra.mxu0 %v509
        %v740 = vpop.f32.mrf.mxu0
        %v741 = vadd.f32 0.0, %v740
        %v742 = vpop.f32.mrf.mxu0
        %743 = vmatprep.mubr.f32.mxu0 %v512
        %744 = vmatmul.mubr.f32.gmra.mxu0 %v511
        %v745 = vpop.f32.mrf.mxu0
        %v746 = vadd.f32 0.0, %v745
        %v747 = vpop.f32.mrf.mxu0
        %748 = vmatprep.mubr.f32.mxu0 %v514
        %749 = vmatmul.mubr.f32.gmra.mxu0 %v513
        %v750 = vpop.f32.mrf.mxu0
        %v751 = vadd.f32 0.0, %v750
        %v752 = vpop.f32.mrf.mxu0
        %753 = vmatprep.mubr.f32.mxu0 %v516
        %754 = vmatmul.mubr.f32.gmra.mxu0 %v515
        %v755 = vpop.f32.mrf.mxu0
        %v756 = vadd.f32 0.0, %v755
        %v757 = vpop.f32.mrf.mxu0
        %758 = vmatprep.mubr.f32.mxu0 %v518
        %759 = vmatmul.mubr.f32.gmra.mxu0 %v517
        %v760 = vpop.f32.mrf.mxu0
        %v761 = vadd.f32 0.0, %v760
        %v762 = vpop.f32.mrf.mxu0
        %763 = vmatprep.mubr.f32.mxu0 %v520
        %764 = vmatmul.mubr.f32.gmra.mxu0 %v519
        %v765 = vpop.f32.mrf.mxu0
        %v766 = vadd.f32 0.0, %v765
        %v767 = vpop.f32.mrf.mxu0
        %768 = vmatprep.mubr.f32.mxu0 %v522
        %769 = vmatmul.mubr.f32.gmra.mxu0 %v521
        %v770 = vpop.f32.mrf.mxu0
        %v771 = vadd.f32 0.0, %v770
        %v772 = vpop.f32.mrf.mxu0
        %773 = vmatprep.mubr.f32.mxu0 %v524
        %774 = vmatmul.mubr.f32.gmra.mxu0 %v523
        %v775 = vpop.f32.mrf.mxu0
        %v776 = vadd.f32 0.0, %v775
        %v777 = vpop.f32.mrf.mxu0
        %778 = vmatprep.mubr.f32.mxu0 %v526
        %779 = vmatmul.mubr.f32.gmra.mxu0 %v525
        %v780 = vpop.f32.mrf.mxu0
        %v781 = vadd.f32 0.0, %v780
        %v782 = vpop.f32.mrf.mxu0
        %783 = vdwg.mxu0
        %v784 = vadd.f32 %v431, %v626
        %v785 = vadd.f32 %v432, %v631
        %v786 = vadd.f32 %v433, %v636
        %v787 = vadd.f32 %v434, %v641
        %v788 = vadd.f32 %v435, %v646
        %v789 = vadd.f32 %v436, %v651
        %v790 = vadd.f32 %v437, %v656
        %v791 = vadd.f32 %v438, %v661
        %v792 = vadd.f32 %v439, %v666
        %v793 = vadd.f32 %v440, %v671
        %v794 = vadd.f32 %v441, %v676
        %v795 = vadd.f32 %v442, %v681
        %v796 = vadd.f32 %v443, %v686
        %v797 = vadd.f32 %v444, %v691
        %v798 = vadd.f32 %v445, %v696
        %v799 = vadd.f32 %v446, %v701
        %v800 = vadd.f32 %v447, %v706
        %v801 = vadd.f32 %v448, %v711
        %v802 = vadd.f32 %v449, %v716
        %v803 = vadd.f32 %v450, %v721
        %v804 = vadd.f32 %v451, %v726
        %v805 = vadd.f32 %v452, %v731
        %v806 = vadd.f32 %v453, %v736
        %v807 = vadd.f32 %v454, %v741
        %v808 = vadd.f32 %v455, %v746
        %v809 = vadd.f32 %v456, %v751
        %v810 = vadd.f32 %v457, %v756
        %v811 = vadd.f32 %v458, %v761
        %v812 = vadd.f32 %v459, %v766
        %v813 = vadd.f32 %v460, %v771
        %v814 = vadd.f32 %v461, %v776
        %v815 = vadd.f32 %v462, %v781
        %816 = vst [vmem:[%s388] sm:$0xff] %v784
        %817 = vst [vmem:[%s388 + $0x8] sm:$0xff] %v785
        %818 = vst [vmem:[%s388 + $0x10] sm:$0xff] %v786
        %819 = vst [vmem:[%s388 + $0x18] sm:$0xff] %v787
        %820 = vst [vmem:[%s388 + $0x20] sm:$0xff] %v788
        %821 = vst [vmem:[%s388 + $0x28] sm:$0xff] %v789
        %822 = vst [vmem:[%s388 + $0x30] sm:$0xff] %v790
        %823 = vst [vmem:[%s388 + $0x38] sm:$0xff] %v791
        %824 = vst [vmem:[%s388 + $0x40] sm:$0xff] %v792
        %825 = vst [vmem:[%s388 + $0x48] sm:$0xff] %v793
        %826 = vst [vmem:[%s388 + $0x50] sm:$0xff] %v794
        %827 = vst [vmem:[%s388 + $0x58] sm:$0xff] %v795
        %828 = vst [vmem:[%s388 + $0x60] sm:$0xff] %v796
        %829 = vst [vmem:[%s388 + $0x68] sm:$0xff] %v797
        %830 = vst [vmem:[%s388 + $0x70] sm:$0xff] %v798
        %831 = vst [vmem:[%s388 + $0x78] sm:$0xff] %v799
        %832 = vst [vmem:[%s388 + $0x80] sm:$0xff] %v800
        %833 = vst [vmem:[%s388 + $0x88] sm:$0xff] %v801
        %834 = vst [vmem:[%s388 + $0x90] sm:$0xff] %v802
        %835 = vst [vmem:[%s388 + $0x98] sm:$0xff] %v803
        %836 = vst [vmem:[%s388 + $0xa0] sm:$0xff] %v804
        %837 = vst [vmem:[%s388 + $0xa8] sm:$0xff] %v805
        %838 = vst [vmem:[%s388 + $0xb0] sm:$0xff] %v806
        %839 = vst [vmem:[%s388 + $0xb8] sm:$0xff] %v807
        %840 = vst [vmem:[%s388 + $0xc0] sm:$0xff] %v808
        %841 = vst [vmem:[%s388 + $0xc8] sm:$0xff] %v809
        %842 = vst [vmem:[%s388 + $0xd0] sm:$0xff] %v810
        %843 = vst [vmem:[%s388 + $0xd8] sm:$0xff] %v811
        %844 = vst [vmem:[%s388 + $0xe0] sm:$0xff] %v812
        %845 = vst [vmem:[%s388 + $0xe8] sm:$0xff] %v813
        %846 = vst [vmem:[%s388 + $0xf0] sm:$0xff] %v814
        %847 = vst [vmem:[%s388 + $0xf8] sm:$0xff] %v815
        %p848 = scmp.eq.s32.totalorder %s31, 1
        // Predicated region
        $region65: #{tpu_custom_call.1} parent=39 // pred_check
          %p849 = pneg %p848
        $region66: #{tpu_custom_call.1} parent=39 // pred_check_branch
          %851 = sbr.rel (%p849) target = $region68
        $region67: #{tpu_custom_call.1} parent=39 // pred_region
          %v852 = vld [vmem:[%s388] sm:$0xff]
          %v853 = vld [vmem:[%s388 + $0x8] sm:$0xff]
          %v854 = vld [vmem:[%s388 + $0x10] sm:$0xff]
          %v855 = vld [vmem:[%s388 + $0x18] sm:$0xff]
          %v856 = vld [vmem:[%s388 + $0x20] sm:$0xff]
          %v857 = vld [vmem:[%s388 + $0x28] sm:$0xff]
          %v858 = vld [vmem:[%s388 + $0x30] sm:$0xff]
          %v859 = vld [vmem:[%s388 + $0x38] sm:$0xff]
          %v860 = vld [vmem:[%s388 + $0x40] sm:$0xff]
          %v861 = vld [vmem:[%s388 + $0x48] sm:$0xff]
          %v862 = vld [vmem:[%s388 + $0x50] sm:$0xff]
          %v863 = vld [vmem:[%s388 + $0x58] sm:$0xff]
          %v864 = vld [vmem:[%s388 + $0x60] sm:$0xff]
          %v865 = vld [vmem:[%s388 + $0x68] sm:$0xff]
          %v866 = vld [vmem:[%s388 + $0x70] sm:$0xff]
          %v867 = vld [vmem:[%s388 + $0x78] sm:$0xff]
          %v868 = vld [vmem:[%s388 + $0x80] sm:$0xff]
          %v869 = vld [vmem:[%s388 + $0x88] sm:$0xff]
          %v870 = vld [vmem:[%s388 + $0x90] sm:$0xff]
          %v871 = vld [vmem:[%s388 + $0x98] sm:$0xff]
          %v872 = vld [vmem:[%s388 + $0xa0] sm:$0xff]
          %v873 = vld [vmem:[%s388 + $0xa8] sm:$0xff]
          %v874 = vld [vmem:[%s388 + $0xb0] sm:$0xff]
          %v875 = vld [vmem:[%s388 + $0xb8] sm:$0xff]
          %v876 = vld [vmem:[%s388 + $0xc0] sm:$0xff]
          %v877 = vld [vmem:[%s388 + $0xc8] sm:$0xff]
          %v878 = vld [vmem:[%s388 + $0xd0] sm:$0xff]
          %v879 = vld [vmem:[%s388 + $0xd8] sm:$0xff]
          %v880 = vld [vmem:[%s388 + $0xe0] sm:$0xff]
          %v881 = vld [vmem:[%s388 + $0xe8] sm:$0xff]
          %v882 = vld [vmem:[%s388 + $0xf0] sm:$0xff]
          %v883 = vld [vmem:[%s388 + $0xf8] sm:$0xff]
          %v884 = vmul.f32 %v852, 0.9
          %v885 = vmul.f32 %v853, 0.9
          %v886 = vmul.f32 %v854, 0.9
          %v887 = vmul.f32 %v855, 0.9
          %v888 = vmul.f32 %v856, 0.9
          %v889 = vmul.f32 %v857, 0.9
          %v890 = vmul.f32 %v858, 0.9
          %v891 = vmul.f32 %v859, 0.9
          %v892 = vmul.f32 %v860, 0.9
          %v893 = vmul.f32 %v861, 0.9
          %v894 = vmul.f32 %v862, 0.9
          %v895 = vmul.f32 %v863, 0.9
          %v896 = vmul.f32 %v864, 0.9
          %v897 = vmul.f32 %v865, 0.9
          %v898 = vmul.f32 %v866, 0.9
          %v899 = vmul.f32 %v867, 0.9
          %v900 = vmul.f32 %v868, 0.9
          %v901 = vmul.f32 %v869, 0.9
          %v902 = vmul.f32 %v870, 0.9
          %v903 = vmul.f32 %v871, 0.9
          %v904 = vmul.f32 %v872, 0.9
          %v905 = vmul.f32 %v873, 0.9
          %v906 = vmul.f32 %v874, 0.9
          %v907 = vmul.f32 %v875, 0.9
          %v908 = vmul.f32 %v876, 0.9
          %v909 = vmul.f32 %v877, 0.9
          %v910 = vmul.f32 %v878, 0.9
          %v911 = vmul.f32 %v879, 0.9
          %v912 = vmul.f32 %v880, 0.9
          %v913 = vmul.f32 %v881, 0.9
          %v914 = vmul.f32 %v882, 0.9
          %v915 = vmul.f32 %v883, 0.9
          %v916 = vld [vmem:[%s334] sm:$0xff]
          %v917 = vld [vmem:[%s334 + $0x8] sm:$0xff]
          %v918 = vld [vmem:[%s334 + $0x10] sm:$0xff]
          %v919 = vld [vmem:[%s334 + $0x18] sm:$0xff]
          %v920 = vld [vmem:[%s334 + $0x20] sm:$0xff]
          %v921 = vld [vmem:[%s334 + $0x28] sm:$0xff]
          %v922 = vld [vmem:[%s334 + $0x30] sm:$0xff]
          %v923 = vld [vmem:[%s334 + $0x38] sm:$0xff]
          %v924 = vld [vmem:[%s334 + $0x40] sm:$0xff]
          %v925 = vld [vmem:[%s334 + $0x48] sm:$0xff]
          %v926 = vld [vmem:[%s334 + $0x50] sm:$0xff]
          %v927 = vld [vmem:[%s334 + $0x58] sm:$0xff]
          %v928 = vld [vmem:[%s334 + $0x60] sm:$0xff]
          %v929 = vld [vmem:[%s334 + $0x68] sm:$0xff]
          %v930 = vld [vmem:[%s334 + $0x70] sm:$0xff]
          %v931 = vld [vmem:[%s334 + $0x78] sm:$0xff]
          %v932 = vld [vmem:[%s334 + $0x80] sm:$0xff]
          %v933 = vld [vmem:[%s334 + $0x88] sm:$0xff]
          %v934 = vld [vmem:[%s334 + $0x90] sm:$0xff]
          %v935 = vld [vmem:[%s334 + $0x98] sm:$0xff]
          %v936 = vld [vmem:[%s334 + $0xa0] sm:$0xff]
          %v937 = vld [vmem:[%s334 + $0xa8] sm:$0xff]
          %v938 = vld [vmem:[%s334 + $0xb0] sm:$0xff]
          %v939 = vld [vmem:[%s334 + $0xb8] sm:$0xff]
          %v940 = vld [vmem:[%s334 + $0xc0] sm:$0xff]
          %v941 = vld [vmem:[%s334 + $0xc8] sm:$0xff]
          %v942 = vld [vmem:[%s334 + $0xd0] sm:$0xff]
          %v943 = vld [vmem:[%s334 + $0xd8] sm:$0xff]
          %v944 = vld [vmem:[%s334 + $0xe0] sm:$0xff]
          %v945 = vld [vmem:[%s334 + $0xe8] sm:$0xff]
          %v946 = vld [vmem:[%s334 + $0xf0] sm:$0xff]
          %v947 = vld [vmem:[%s334 + $0xf8] sm:$0xff]
          %v948 = vmul.f32 %v916, 0.1
          %v949 = vmul.f32 %v917, 0.1
          %v950 = vmul.f32 %v918, 0.1
          %v951 = vmul.f32 %v919, 0.1
          %v952 = vmul.f32 %v920, 0.1
          %v953 = vmul.f32 %v921, 0.1
          %v954 = vmul.f32 %v922, 0.1
          %v955 = vmul.f32 %v923, 0.1
          %v956 = vmul.f32 %v924, 0.1
          %v957 = vmul.f32 %v925, 0.1
          %v958 = vmul.f32 %v926, 0.1
          %v959 = vmul.f32 %v927, 0.1
          %v960 = vmul.f32 %v928, 0.1
          %v961 = vmul.f32 %v929, 0.1
          %v962 = vmul.f32 %v930, 0.1
          %v963 = vmul.f32 %v931, 0.1
          %v964 = vmul.f32 %v932, 0.1
          %v965 = vmul.f32 %v933, 0.1
          %v966 = vmul.f32 %v934, 0.1
          %v967 = vmul.f32 %v935, 0.1
          %v968 = vmul.f32 %v936, 0.1
          %v969 = vmul.f32 %v937, 0.1
          %v970 = vmul.f32 %v938, 0.1
          %v971 = vmul.f32 %v939, 0.1
          %v972 = vmul.f32 %v940, 0.1
          %v973 = vmul.f32 %v941, 0.1
          %v974 = vmul.f32 %v942, 0.1
          %v975 = vmul.f32 %v943, 0.1
          %v976 = vmul.f32 %v944, 0.1
          %v977 = vmul.f32 %v945, 0.1
          %v978 = vmul.f32 %v946, 0.1
          %v979 = vmul.f32 %v947, 0.1
          %v980 = vadd.f32 %v884, %v948
          %v981 = vadd.f32 %v885, %v949
          %v982 = vadd.f32 %v886, %v950
          %v983 = vadd.f32 %v887, %v951
          %v984 = vadd.f32 %v888, %v952
          %v985 = vadd.f32 %v889, %v953
          %v986 = vadd.f32 %v890, %v954
          %v987 = vadd.f32 %v891, %v955
          %v988 = vadd.f32 %v892, %v956
          %v989 = vadd.f32 %v893, %v957
          %v990 = vadd.f32 %v894, %v958
          %v991 = vadd.f32 %v895, %v959
          %v992 = vadd.f32 %v896, %v960
          %v993 = vadd.f32 %v897, %v961
          %v994 = vadd.f32 %v898, %v962
          %v995 = vadd.f32 %v899, %v963
          %v996 = vadd.f32 %v900, %v964
          %v997 = vadd.f32 %v901, %v965
          %v998 = vadd.f32 %v902, %v966
          %v999 = vadd.f32 %v903, %v967
          %v1000 = vadd.f32 %v904, %v968
          %v1001 = vadd.f32 %v905, %v969
          %v1002 = vadd.f32 %v906, %v970
          %v1003 = vadd.f32 %v907, %v971
          %v1004 = vadd.f32 %v908, %v972
          %v1005 = vadd.f32 %v909, %v973
          %v1006 = vadd.f32 %v910, %v974
          %v1007 = vadd.f32 %v911, %v975
          %v1008 = vadd.f32 %v912, %v976
          %v1009 = vadd.f32 %v913, %v977
          %v1010 = vadd.f32 %v914, %v978
          %v1011 = vadd.f32 %v915, %v979
          %v1012 = vld [vmem:[#allocation8] sm:$0xff]
          %v1013 = vld [vmem:[#allocation8 + $0x8] sm:$0xff]
          %v1014 = vld [vmem:[#allocation8 + $0x10] sm:$0xff]
          %v1015 = vld [vmem:[#allocation8 + $0x18] sm:$0xff]
          %v1016 = vld [vmem:[#allocation8 + $0x20] sm:$0xff]
          %v1017 = vld [vmem:[#allocation8 + $0x28] sm:$0xff]
          %v1018 = vld [vmem:[#allocation8 + $0x30] sm:$0xff]
          %v1019 = vld [vmem:[#allocation8 + $0x38] sm:$0xff]
          %v1020 = vld [vmem:[#allocation8 + $0x40] sm:$0xff]
          %v1021 = vld [vmem:[#allocation8 + $0x48] sm:$0xff]
          %v1022 = vld [vmem:[#allocation8 + $0x50] sm:$0xff]
          %v1023 = vld [vmem:[#allocation8 + $0x58] sm:$0xff]
          %v1024 = vld [vmem:[#allocation8 + $0x60] sm:$0xff]
          %v1025 = vld [vmem:[#allocation8 + $0x68] sm:$0xff]
          %v1026 = vld [vmem:[#allocation8 + $0x70] sm:$0xff]
          %v1027 = vld [vmem:[#allocation8 + $0x78] sm:$0xff]
          %v1028 = vld [vmem:[%s347] sm:$0xff]
          %v1029 = vld [vmem:[%s347 + $0x8] sm:$0xff]
          %v1030 = vld [vmem:[%s347 + $0x10] sm:$0xff]
          %v1031 = vld [vmem:[%s347 + $0x18] sm:$0xff]
          %v1032 = vld [vmem:[%s347 + $0x20] sm:$0xff]
          %v1033 = vld [vmem:[%s347 + $0x28] sm:$0xff]
          %v1034 = vld [vmem:[%s347 + $0x30] sm:$0xff]
          %v1035 = vld [vmem:[%s347 + $0x38] sm:$0xff]
          %v1036 = vld [vmem:[%s347 + $0x40] sm:$0xff]
          %v1037 = vld [vmem:[%s347 + $0x48] sm:$0xff]
          %v1038 = vld [vmem:[%s347 + $0x50] sm:$0xff]
          %v1039 = vld [vmem:[%s347 + $0x58] sm:$0xff]
          %v1040 = vld [vmem:[%s347 + $0x60] sm:$0xff]
          %v1041 = vld [vmem:[%s347 + $0x68] sm:$0xff]
          %v1042 = vld [vmem:[%s347 + $0x70] sm:$0xff]
          %v1043 = vld [vmem:[%s347 + $0x78] sm:$0xff]
          %v1044 = vld [vmem:[%s347 + $0x80] sm:$0xff]
          %v1045 = vld [vmem:[%s347 + $0x88] sm:$0xff]
          %v1046 = vld [vmem:[%s347 + $0x90] sm:$0xff]
          %v1047 = vld [vmem:[%s347 + $0x98] sm:$0xff]
          %v1048 = vld [vmem:[%s347 + $0xa0] sm:$0xff]
          %v1049 = vld [vmem:[%s347 + $0xa8] sm:$0xff]
          %v1050 = vld [vmem:[%s347 + $0xb0] sm:$0xff]
          %v1051 = vld [vmem:[%s347 + $0xb8] sm:$0xff]
          %v1052 = vld [vmem:[%s347 + $0xc0] sm:$0xff]
          %v1053 = vld [vmem:[%s347 + $0xc8] sm:$0xff]
          %v1054 = vld [vmem:[%s347 + $0xd0] sm:$0xff]
          %v1055 = vld [vmem:[%s347 + $0xd8] sm:$0xff]
          %v1056 = vld [vmem:[%s347 + $0xe0] sm:$0xff]
          %v1057 = vld [vmem:[%s347 + $0xe8] sm:$0xff]
          %v1058 = vld [vmem:[%s347 + $0xf0] sm:$0xff]
          %v1059 = vld [vmem:[%s347 + $0xf8] sm:$0xff]
          %1060 = vmatprep.subr.mxu0 0.0
          %1061 = vmatpush1.msra.mxu0 %v1027
          %1062 = vmatprep.subr.mxu0 0.0
          %1063 = vmatpush1.msra.mxu0 %v1026
          %1064 = vmatprep.subr.mxu0 0.0
          %1065 = vmatpush1.msra.mxu0 %v1025
          %1066 = vmatprep.subr.mxu0 0.0
          %1067 = vmatpush1.msra.mxu0 %v1024
          %1068 = vmatprep.subr.mxu0 0.0
          %1069 = vmatpush1.msra.mxu0 %v1023
          %1070 = vmatprep.subr.mxu0 0.0
          %1071 = vmatpush1.msra.mxu0 %v1022
          %1072 = vmatprep.subr.mxu0 0.0
          %1073 = vmatpush1.msra.mxu0 %v1021
          %1074 = vmatprep.subr.mxu0 0.0
          %1075 = vmatpush1.msra.mxu0 %v1020
          %1076 = vmatprep.subr.mxu0 0.0
          %1077 = vmatpush1.msra.mxu0 %v1019
          %1078 = vmatprep.subr.mxu0 0.0
          %1079 = vmatpush1.msra.mxu0 %v1018
          %1080 = vmatprep.subr.mxu0 0.0
          %1081 = vmatpush1.msra.mxu0 %v1017
          %1082 = vmatprep.subr.mxu0 0.0
          %1083 = vmatpush1.msra.mxu0 %v1016
          %1084 = vmatprep.subr.mxu0 0.0
          %1085 = vmatpush1.msra.mxu0 %v1015
          %1086 = vmatprep.subr.mxu0 0.0
          %1087 = vmatpush1.msra.mxu0 %v1014
          %1088 = vmatprep.subr.mxu0 0.0
          %1089 = vmatpush1.msra.mxu0 %v1013
          %1090 = vmatprep.subr.mxu0 0.0
          %1091 = vmatpush1.msra.mxu0 %v1012
          %1092 = vmatprep.subr.mxu0 0.0
          %1093 = vmatpush2.msra.mxu0 0.0
          %1094 = vmatprep.subr.mxu0 0.0
          %1095 = vmatpush2.msra.mxu0 0.0
          %1096 = vmatprep.subr.mxu0 0.0
          %1097 = vmatpush2.msra.mxu0 0.0
          %1098 = vmatprep.subr.mxu0 0.0
          %1099 = vmatpush2.msra.mxu0 0.0
          %1100 = vmatprep.subr.mxu0 0.0
          %1101 = vmatpush2.msra.mxu0 0.0
          %1102 = vmatprep.subr.mxu0 0.0
          %1103 = vmatpush2.msra.mxu0 0.0
          %1104 = vmatprep.subr.mxu0 0.0
          %1105 = vmatpush2.msra.mxu0 0.0
          %1106 = vmatprep.subr.mxu0 0.0
          %1107 = vmatpush2.msra.mxu0 0.0
          %1108 = vmatprep.subr.mxu0 0.0
          %1109 = vmatpush2.msra.mxu0 0.0
          %1110 = vmatprep.subr.mxu0 0.0
          %1111 = vmatpush2.msra.mxu0 0.0
          %1112 = vmatprep.subr.mxu0 0.0
          %1113 = vmatpush2.msra.mxu0 0.0
          %1114 = vmatprep.subr.mxu0 0.0
          %1115 = vmatpush2.msra.mxu0 0.0
          %1116 = vmatprep.subr.mxu0 0.0
          %1117 = vmatpush2.msra.mxu0 0.0
          %1118 = vmatprep.subr.mxu0 0.0
          %1119 = vmatpush2.msra.mxu0 0.0
          %1120 = vmatprep.subr.mxu0 0.0
          %1121 = vmatpush2.msra.mxu0 0.0
          %1122 = vmatprep.subr.mxu0 0.0
          %1123 = vmatpush2.msra.mxu0 0.0
          %1124 = vmatprep.mubr.f32.mxu0 0.0
          %1125 = vmatmul.mubr.f32.gmra.mxu0 %v980
          %v1126 = vpop.f32.mrf.mxu0
          %v1127 = vadd.f32 %v1028, %v1126
          %v1128 = vpop.f32.mrf.mxu0
          %1129 = vmatprep.mubr.f32.mxu0 0.0
          %1130 = vmatmul.mubr.f32.gmra.mxu0 %v981
          %v1131 = vpop.f32.mrf.mxu0
          %v1132 = vadd.f32 %v1029, %v1131
          %v1133 = vpop.f32.mrf.mxu0
          %1134 = vmatprep.mubr.f32.mxu0 0.0
          %1135 = vmatmul.mubr.f32.gmra.mxu0 %v982
          %v1136 = vpop.f32.mrf.mxu0
          %v1137 = vadd.f32 %v1030, %v1136
          %v1138 = vpop.f32.mrf.mxu0
          %1139 = vmatprep.mubr.f32.mxu0 0.0
          %1140 = vmatmul.mubr.f32.gmra.mxu0 %v983
          %v1141 = vpop.f32.mrf.mxu0
          %v1142 = vadd.f32 %v1031, %v1141
          %v1143 = vpop.f32.mrf.mxu0
          %1144 = vmatprep.mubr.f32.mxu0 0.0
          %1145 = vmatmul.mubr.f32.gmra.mxu0 %v984
          %v1146 = vpop.f32.mrf.mxu0
          %v1147 = vadd.f32 %v1032, %v1146
          %v1148 = vpop.f32.mrf.mxu0
          %1149 = vmatprep.mubr.f32.mxu0 0.0
          %1150 = vmatmul.mubr.f32.gmra.mxu0 %v985
          %v1151 = vpop.f32.mrf.mxu0
          %v1152 = vadd.f32 %v1033, %v1151
          %v1153 = vpop.f32.mrf.mxu0
          %1154 = vmatprep.mubr.f32.mxu0 0.0
          %1155 = vmatmul.mubr.f32.gmra.mxu0 %v986
          %v1156 = vpop.f32.mrf.mxu0
          %v1157 = vadd.f32 %v1034, %v1156
          %v1158 = vpop.f32.mrf.mxu0
          %1159 = vmatprep.mubr.f32.mxu0 0.0
          %1160 = vmatmul.mubr.f32.gmra.mxu0 %v987
          %v1161 = vpop.f32.mrf.mxu0
          %v1162 = vadd.f32 %v1035, %v1161
          %v1163 = vpop.f32.mrf.mxu0
          %1164 = vmatprep.mubr.f32.mxu0 0.0
          %1165 = vmatmul.mubr.f32.gmra.mxu0 %v988
          %v1166 = vpop.f32.mrf.mxu0
          %v1167 = vadd.f32 %v1036, %v1166
          %v1168 = vpop.f32.mrf.mxu0
          %1169 = vmatprep.mubr.f32.mxu0 0.0
          %1170 = vmatmul.mubr.f32.gmra.mxu0 %v989
          %v1171 = vpop.f32.mrf.mxu0
          %v1172 = vadd.f32 %v1037, %v1171
          %v1173 = vpop.f32.mrf.mxu0
          %1174 = vmatprep.mubr.f32.mxu0 0.0
          %1175 = vmatmul.mubr.f32.gmra.mxu0 %v990
          %v1176 = vpop.f32.mrf.mxu0
          %v1177 = vadd.f32 %v1038, %v1176
          %v1178 = vpop.f32.mrf.mxu0
          %1179 = vmatprep.mubr.f32.mxu0 0.0
          %1180 = vmatmul.mubr.f32.gmra.mxu0 %v991
          %v1181 = vpop.f32.mrf.mxu0
          %v1182 = vadd.f32 %v1039, %v1181
          %v1183 = vpop.f32.mrf.mxu0
          %1184 = vmatprep.mubr.f32.mxu0 0.0
          %1185 = vmatmul.mubr.f32.gmra.mxu0 %v992
          %v1186 = vpop.f32.mrf.mxu0
          %v1187 = vadd.f32 %v1040, %v1186
          %v1188 = vpop.f32.mrf.mxu0
          %1189 = vmatprep.mubr.f32.mxu0 0.0
          %1190 = vmatmul.mubr.f32.gmra.mxu0 %v993
          %v1191 = vpop.f32.mrf.mxu0
          %v1192 = vadd.f32 %v1041, %v1191
          %v1193 = vpop.f32.mrf.mxu0
          %1194 = vmatprep.mubr.f32.mxu0 0.0
          %1195 = vmatmul.mubr.f32.gmra.mxu0 %v994
          %v1196 = vpop.f32.mrf.mxu0
          %v1197 = vadd.f32 %v1042, %v1196
          %v1198 = vpop.f32.mrf.mxu0
          %1199 = vmatprep.mubr.f32.mxu0 0.0
          %1200 = vmatmul.mubr.f32.gmra.mxu0 %v995
          %v1201 = vpop.f32.mrf.mxu0
          %v1202 = vadd.f32 %v1043, %v1201
          %v1203 = vpop.f32.mrf.mxu0
          %1204 = vmatprep.mubr.f32.mxu0 0.0
          %1205 = vmatmul.mubr.f32.gmra.mxu0 %v996
          %v1206 = vpop.f32.mrf.mxu0
          %v1207 = vadd.f32 %v1044, %v1206
          %v1208 = vpop.f32.mrf.mxu0
          %1209 = vmatprep.mubr.f32.mxu0 0.0
          %1210 = vmatmul.mubr.f32.gmra.mxu0 %v997
          %v1211 = vpop.f32.mrf.mxu0
          %v1212 = vadd.f32 %v1045, %v1211
          %v1213 = vpop.f32.mrf.mxu0
          %1214 = vmatprep.mubr.f32.mxu0 0.0
          %1215 = vmatmul.mubr.f32.gmra.mxu0 %v998
          %v1216 = vpop.f32.mrf.mxu0
          %v1217 = vadd.f32 %v1046, %v1216
          %v1218 = vpop.f32.mrf.mxu0
          %1219 = vmatprep.mubr.f32.mxu0 0.0
          %1220 = vmatmul.mubr.f32.gmra.mxu0 %v999
          %v1221 = vpop.f32.mrf.mxu0
          %v1222 = vadd.f32 %v1047, %v1221
          %v1223 = vpop.f32.mrf.mxu0
          %1224 = vmatprep.mubr.f32.mxu0 0.0
          %1225 = vmatmul.mubr.f32.gmra.mxu0 %v1000
          %v1226 = vpop.f32.mrf.mxu0
          %v1227 = vadd.f32 %v1048, %v1226
          %v1228 = vpop.f32.mrf.mxu0
          %1229 = vmatprep.mubr.f32.mxu0 0.0
          %1230 = vmatmul.mubr.f32.gmra.mxu0 %v1001
          %v1231 = vpop.f32.mrf.mxu0
          %v1232 = vadd.f32 %v1049, %v1231
          %v1233 = vpop.f32.mrf.mxu0
          %1234 = vmatprep.mubr.f32.mxu0 0.0
          %1235 = vmatmul.mubr.f32.gmra.mxu0 %v1002
          %v1236 = vpop.f32.mrf.mxu0
          %v1237 = vadd.f32 %v1050, %v1236
          %v1238 = vpop.f32.mrf.mxu0
          %1239 = vmatprep.mubr.f32.mxu0 0.0
          %1240 = vmatmul.mubr.f32.gmra.mxu0 %v1003
          %v1241 = vpop.f32.mrf.mxu0
          %v1242 = vadd.f32 %v1051, %v1241
          %v1243 = vpop.f32.mrf.mxu0
          %1244 = vmatprep.mubr.f32.mxu0 0.0
          %1245 = vmatmul.mubr.f32.gmra.mxu0 %v1004
          %v1246 = vpop.f32.mrf.mxu0
          %v1247 = vadd.f32 %v1052, %v1246
          %v1248 = vpop.f32.mrf.mxu0
          %1249 = vmatprep.mubr.f32.mxu0 0.0
          %1250 = vmatmul.mubr.f32.gmra.mxu0 %v1005
          %v1251 = vpop.f32.mrf.mxu0
          %v1252 = vadd.f32 %v1053, %v1251
          %v1253 = vpop.f32.mrf.mxu0
          %1254 = vmatprep.mubr.f32.mxu0 0.0
          %1255 = vmatmul.mubr.f32.gmra.mxu0 %v1006
          %v1256 = vpop.f32.mrf.mxu0
          %v1257 = vadd.f32 %v1054, %v1256
          %v1258 = vpop.f32.mrf.mxu0
          %1259 = vmatprep.mubr.f32.mxu0 0.0
          %1260 = vmatmul.mubr.f32.gmra.mxu0 %v1007
          %v1261 = vpop.f32.mrf.mxu0
          %v1262 = vadd.f32 %v1055, %v1261
          %v1263 = vpop.f32.mrf.mxu0
          %1264 = vmatprep.mubr.f32.mxu0 0.0
          %1265 = vmatmul.mubr.f32.gmra.mxu0 %v1008
          %v1266 = vpop.f32.mrf.mxu0
          %v1267 = vadd.f32 %v1056, %v1266
          %v1268 = vpop.f32.mrf.mxu0
          %1269 = vmatprep.mubr.f32.mxu0 0.0
          %1270 = vmatmul.mubr.f32.gmra.mxu0 %v1009
          %v1271 = vpop.f32.mrf.mxu0
          %v1272 = vadd.f32 %v1057, %v1271
          %v1273 = vpop.f32.mrf.mxu0
          %1274 = vmatprep.mubr.f32.mxu0 0.0
          %1275 = vmatmul.mubr.f32.gmra.mxu0 %v1010
          %v1276 = vpop.f32.mrf.mxu0
          %v1277 = vadd.f32 %v1058, %v1276
          %v1278 = vpop.f32.mrf.mxu0
          %1279 = vmatprep.mubr.f32.mxu0 0.0
          %1280 = vmatmul.mubr.f32.gmra.mxu0 %v1011
          %v1281 = vpop.f32.mrf.mxu0
          %v1282 = vadd.f32 %v1059, %v1281
          %v1283 = vpop.f32.mrf.mxu0
          %1284 = vdwg.mxu0
          %1285 = vst [vmem:[%s388] sm:$0xff] %v1127
          %1286 = vst [vmem:[%s388 + $0x8] sm:$0xff] %v1132
          %1287 = vst [vmem:[%s388 + $0x10] sm:$0xff] %v1137
          %1288 = vst [vmem:[%s388 + $0x18] sm:$0xff] %v1142
          %1289 = vst [vmem:[%s388 + $0x20] sm:$0xff] %v1147
          %1290 = vst [vmem:[%s388 + $0x28] sm:$0xff] %v1152
          %1291 = vst [vmem:[%s388 + $0x30] sm:$0xff] %v1157
          %1292 = vst [vmem:[%s388 + $0x38] sm:$0xff] %v1162
          %1293 = vst [vmem:[%s388 + $0x40] sm:$0xff] %v1167
          %1294 = vst [vmem:[%s388 + $0x48] sm:$0xff] %v1172
          %1295 = vst [vmem:[%s388 + $0x50] sm:$0xff] %v1177
          %1296 = vst [vmem:[%s388 + $0x58] sm:$0xff] %v1182
          %1297 = vst [vmem:[%s388 + $0x60] sm:$0xff] %v1187
          %1298 = vst [vmem:[%s388 + $0x68] sm:$0xff] %v1192
          %1299 = vst [vmem:[%s388 + $0x70] sm:$0xff] %v1197
          %1300 = vst [vmem:[%s388 + $0x78] sm:$0xff] %v1202
          %1301 = vst [vmem:[%s388 + $0x80] sm:$0xff] %v1207
          %1302 = vst [vmem:[%s388 + $0x88] sm:$0xff] %v1212
          %1303 = vst [vmem:[%s388 + $0x90] sm:$0xff] %v1217
          %1304 = vst [vmem:[%s388 + $0x98] sm:$0xff] %v1222
          %1305 = vst [vmem:[%s388 + $0xa0] sm:$0xff] %v1227
          %1306 = vst [vmem:[%s388 + $0xa8] sm:$0xff] %v1232
          %1307 = vst [vmem:[%s388 + $0xb0] sm:$0xff] %v1237
          %1308 = vst [vmem:[%s388 + $0xb8] sm:$0xff] %v1242
          %1309 = vst [vmem:[%s388 + $0xc0] sm:$0xff] %v1247
          %1310 = vst [vmem:[%s388 + $0xc8] sm:$0xff] %v1252
          %1311 = vst [vmem:[%s388 + $0xd0] sm:$0xff] %v1257
          %1312 = vst [vmem:[%s388 + $0xd8] sm:$0xff] %v1262
          %1313 = vst [vmem:[%s388 + $0xe0] sm:$0xff] %v1267
          %1314 = vst [vmem:[%s388 + $0xe8] sm:$0xff] %v1272
          %1315 = vst [vmem:[%s388 + $0xf0] sm:$0xff] %v1277
          %1316 = vst [vmem:[%s388 + $0xf8] sm:$0xff] %v1282
        $region68: #{tpu_custom_call.1} parent=39 // pred_fallthru
          _
        %s1317 = sand.u32 %s173, 1
        %s1318 = scalar_lea.sflag [#allocation4], %s1317
        %s1319 = sand.u32 %s173, 1
        %s1320 = smul.addr %s1319, 256
        %s1321 = scalar_lea.vmem [#allocation11], %s1320
        // Predicated region
        $region69: #{tpu_custom_call.1} parent=39 // pred_check
          %p1322 = pneg %p183
        $region70: #{tpu_custom_call.1} parent=39 // pred_check_branch
          %1324 = sbr.rel (%p1322) target = $region72
        $region71: #{tpu_custom_call.1} parent=39 // pred_region
          %s1325 = smul.u32 32, %s30
          %s1327 = ssub.s32 4096, 4096
          %1328 = vsyncadd %s1318, %s1327
          %s1329 = smul.addr %s1325, 128
          %s1330 = scalar_lea.hbm %s5, %s1329
          %s1331 = sshll.u32 %s1321, 4
          %s1332 = int_to_ptr.vmem [resolvable:$true] %s1331
          %1337 = dma.vmem_to_hbm [thread:$0]  %s1332, 4096, %s1330, %s1318, 128, 128, 8
        $region72: #{tpu_custom_call.1} parent=39 // pred_fallthru
          _
      $region40: #{tpu_custom_call.1} parent=5 // pred_fallthru
        _
      %p1338 = scmp.le.s32.totalorder 2, %s21
      // Predicated region
      $region73: #{tpu_custom_call.1} parent=5 // pred_check
        %p1339 = pneg %p1338
      $region74: #{tpu_custom_call.1} parent=5 // pred_check_branch
        %1341 = sbr.rel (%p1339) target = $region76
      $region75: #{tpu_custom_call.1} parent=5 // pred_region
        %s1342 = ssub.s32 %s21, 2
        // Predicated region
        $region77: #{tpu_custom_call.1} parent=75 // pred_check
          %p1343 = pneg %p189
        $region78: #{tpu_custom_call.1} parent=75 // pred_check_branch
          %1345 = sbr.rel (%p1343) target = $region80
        $region79: #{tpu_custom_call.1} parent=75 // pred_region
          %s1346 = sand.u32 %s174, 1
          %s1347 = scalar_lea.sflag [#allocation4], %s1346
          %s1348 = sand.u32 %s174, 1
          %s1349 = smul.addr %s1348, 256
          %s1350 = scalar_lea.vmem [#allocation11], %s1349
          %1351 = dma.done %s1347, 4096
        $region80: #{tpu_custom_call.1} parent=75 // pred_fallthru
          _
      $region76: #{tpu_custom_call.1} parent=5 // pred_fallthru
        _
    $region6: #{tpu_custom_call.1} parent=1 // loop_footer
      %s25 = sadd.s32 1, %s21
    $region7: #{tpu_custom_call.1} parent=1 // loop_footer_branch
      %20 = sbr.rel target = $region3
    $region8: #{tpu_custom_call.1} parent=1 // loop_exit
      _
    %1352 = vsyncpa [#allocation3], 1
    %s1353 = scalar_lea.sflag [#allocation3], 1
    %1354 = vsyncpa %s1353, 1
    %1355 = vsyncpa [#allocation6], 1
    %s1356 = scalar_lea.sflag [#allocation6], 1
    %1357 = vsyncpa %s1356, 1
    %1358 = vsyncpa [#allocation9], 1
    %1359 = vsyncpa [#allocation4], 1
    %s1360 = scalar_lea.sflag [#allocation4], 1
    %1361 = vsyncpa %s1360, 1

</llo_original>
